<compile_context>
chip_gen: v7x
topology: tpu7x:2x2x1
jax: 0.10.0
libtpu: 0.0.40
codegen_flags: <defaults>
</compile_context>

<pallas_src>
import functools

import jax
import jax.numpy as jnp
from jax.experimental import pallas as pl
from jax.experimental.pallas import tpu as pltpu

ACT_SCALE = 1.0  # TODO(synk): `act_scale_value` is undefined in the torch source; fixed to 1.0.
H1 = 100  # h_size_1
H2 = 100  # h_size_2
LANES = 128


def _round_up(n, m):
    return ((n + m - 1) // m) * m


# ----------------------------------------------------------------------------
# Kernel
# ----------------------------------------------------------------------------
def _parallel_forward_kernel(cfg, act_ref, w_ref, b_ref, out_ref):
    (B, C, dim_input, dim_output, dim_lat, dim_h, num_h, d_ctx,
     v_off, pv_cols, row_off, act_scale) = cfg

    def dot(x, w):  # bf16 MXU operands, f32 accumulation
        return jnp.dot(x.astype(jnp.bfloat16), w, preferred_element_type=jnp.float32)

    def wseg(name, rows, cols):  # static zero-cost view into the weight blob
        r0 = row_off[name]
        return w_ref[r0:r0 + rows, 0:cols]

    def bias(i, cols):  # one bias vector per row of the bias blob
        return b_ref[i:i + 1, 0:cols]

    rB = _round_up(B, 8)
    rC = _round_up(C, 8)
    x_in = act_ref[0:B, 0:dim_input]                    # (B, dim_input)
    ctx = act_ref[rB:rB + C, 0:d_ctx]                   # (C, d_ctx)
    eps = act_ref[rB + rC:rB + rC + 1, 0:dim_lat]       # (1, dim_lat)

    # ---- task encoder: context_net = Linear -> (ReLU -> Linear) * num_h ----
    h = ctx
    in_dim = d_ctx
    for layer in range(num_h + 1):
        if layer > 0:
            h = jnp.maximum(h, 0.0)
        h = dot(h, wseg("ctx%d" % layer, in_dim, dim_h)) + bias(layer, dim_h)
        in_dim = dim_h
    # torch: 2-D context_obs -> mean over dim 0 (single task embedding)
    h = jnp.mean(h, axis=0, keepdims=True)              # (1, dim_h)

    # fused mu_net | logvar_net head (one MXU pass)
    ml = dot(h, wseg("ml", dim_h, 2 * dim_lat)) + bias(num_h + 1, 2 * dim_lat)
    mu_p = ml[:, 0:dim_lat]
    logvar_p = ml[:, dim_lat:2 * dim_lat]
    z_p = mu_p + eps * jnp.exp(0.5 * logvar_p)          # (1, dim_lat), reparam

    # ---- fused p_fc1 | v_fc1 : cat((inputs, z_p), -1) @ W == split matmul ----
    h_pv = (dot(x_in, wseg("pv_x", dim_input, pv_cols))
            + dot(z_p, wseg("pv_z", dim_lat, pv_cols))
            + bias(num_h + 2, pv_cols))                 # (B, 628)
    h_pv = jnp.maximum(h_pv, 0.0)
    xp = h_pv[:, 0:H1]                                  # policy lanes [0:100]
    xv = h_pv[:, v_off:v_off + 5 * H1]                  # value lanes [128:628] (tile aligned)

    # ---- policy branch ----
    xp = jnp.tanh(dot(xp, wseg("p_fc2", H1, H2)) + bias(num_h + 3, H2))
    mu = act_scale * jnp.tanh(dot(xp, wseg("mu", H2, dim_output))
                              + bias(num_h + 5, dim_output))

    # ---- value branch ----
    xv = jnp.tanh(dot(xv, wseg("v_fc2", 5 * H1, H2)) + bias(num_h + 4, H2))
    v = dot(xv, wseg("v", H2, 1)) + bias(num_h + 6, 1)

    # ---- single lane-dense output slab ----
    o_v = dim_output
    o_mup = o_v + 1
    o_lv = o_mup + dim_lat
    o_zp = o_lv + dim_lat
    out_ref[...] = jnp.zeros_like(out_ref)
    out_ref[0:B, 0:dim_output] = mu
    out_ref[0:B, o_v:o_v + 1] = v
    out_ref[0:1, o_mup:o_mup + dim_lat] = mu_p
    out_ref[0:1, o_lv:o_lv + dim_lat] = logvar_p
    out_ref[0:1, o_zp:o_zp + dim_lat] = z_p


# ----------------------------------------------------------------------------
# Parameters: plain init (mirrors the torch module) + one-time packing
# ----------------------------------------------------------------------------
def init_params(key, dim_input, dim_output, dim_obs_x, dim_obs_y, dim_lat,
                dim_h, num_h):
    d_ctx = dim_obs_x + dim_obs_y
    keys = jax.random.split(key, num_h + 9)
    ki = iter(keys)

    def w(fan_in, fan_out):
        bound = 1.0 / float(fan_in) ** 0.5
        return jax.random.uniform(next(ki), (fan_in, fan_out), jnp.float32,
                                  -bound, bound)

    p = {}
    p["ctx_w"] = [w(d_ctx, dim_h)] + [w(dim_h, dim_h) for _ in range(num_h)]
    p["ctx_b"] = [jnp.zeros((dim_h,), jnp.float32) for _ in range(num_h + 1)]
    p["mu_net_w"], p["mu_net_b"] = w(dim_h, dim_lat), jnp.zeros((dim_lat,), jnp.float32)
    p["lv_net_w"], p["lv_net_b"] = w(dim_h, dim_lat), jnp.zeros((dim_lat,), jnp.float32)
    p["p_fc1_w"], p["p_fc1_b"] = w(dim_input + dim_lat, H1), jnp.zeros((H1,), jnp.float32)
    p["p_fc2_w"], p["p_fc2_b"] = w(H1, H2), jnp.zeros((H2,), jnp.float32)
    p["v_fc1_w"], p["v_fc1_b"] = w(dim_input + dim_lat, 5 * H1), jnp.zeros((5 * H1,), jnp.float32)
    p["v_fc2_w"], p["v_fc2_b"] = w(5 * H1, H2), jnp.zeros((H2,), jnp.float32)
    p["mu_w"], p["mu_b"] = w(H2, dim_output), jnp.zeros((dim_output,), jnp.float32)
    p["v_w"], p["v_b"] = w(H2, 1), jnp.zeros((1,), jnp.float32)
    p["log_std"] = jnp.full((dim_output,), -2.3, jnp.float32)
    return p


def pack_params(p, dim_input, dim_output, dim_lat, dim_h, num_h, d_ctx):
    """One-time packing into (bf16 weight blob, f32 bias blob, static layout)."""
    v_off = _round_up(H1, LANES)                 # value lanes start tile aligned
    pv_cols = v_off + 5 * H1                     # 128 + 500 = 628
    cols = _round_up(max(dim_h, 2 * dim_lat, pv_cols, H2, dim_output, 1), LANES)

    # fused p_fc1 | v_fc1, split by input operand (x rows vs z rows)
    pv_x = jnp.zeros((dim_input, pv_cols), jnp.float32)
    pv_x = pv_x.at[:, :H1].set(p["p_fc1_w"][:dim_input])
    pv_x = pv_x.at[:, v_off:].set(p["v_fc1_w"][:dim_input])
    pv_z = jnp.zeros((dim_lat, pv_cols), jnp.float32)
    pv_z = pv_z.at[:, :H1].set(p["p_fc1_w"][dim_input:])
    pv_z = pv_z.at[:, v_off:].set(p["v_fc1_w"][dim_input:])
    w_ml = jnp.concatenate([p["mu_net_w"], p["lv_net_w"]], axis=1)

    segs = [("ctx%d" % i, wi.shape[0], dim_h, wi) for i, wi in enumerate(p["ctx_w"])]
    segs += [("ml", dim_h, 2 * dim_lat, w_ml),
             ("pv_x", dim_input, pv_cols, pv_x),
             ("pv_z", dim_lat, pv_cols, pv_z),
             ("p_fc2", H1, H2, p["p_fc2_w"]),
             ("v_fc2", 5 * H1, H2, p["v_fc2_w"]),
             ("mu", H2, dim_output, p["mu_w"]),
             ("v", H2, 1, p["v_w"])]

    row_off, blocks, r = {}, [], 0
    for name, rows, c, arr in segs:
        row_off[name] = r
        rp = _round_up(rows, 16)                 # bf16 packs 16 sublanes / vreg
        blocks.append(jnp.zeros((rp, cols), jnp.float32).at[:rows, :c].set(arr))
        r += rp
    w_blob = jnp.concatenate(blocks, axis=0).astype(jnp.bfloat16)

    biases = list(p["ctx_b"])
    biases.append(jnp.concatenate([p["mu_net_b"], p["lv_net_b"]]))
    pv_b = jnp.zeros((pv_cols,), jnp.float32).at[:H1].set(p["p_fc1_b"]).at[v_off:].set(p["v_fc1_b"])
    biases += [pv_b, p["p_fc2_b"], p["v_fc2_b"], p["mu_b"], p["v_b"]]
    b_blob = jnp.zeros((_round_up(len(biases), 8), cols), jnp.float32)
    for i, b in enumerate(biases):
        b_blob = b_blob.at[i, :b.shape[0]].set(b)

    layout = dict(cols=cols, v_off=v_off, pv_cols=pv_cols, row_off=row_off)
    return w_blob, b_blob, layout


# ----------------------------------------------------------------------------
# Wrapper
# ----------------------------------------------------------------------------
def parallel_forward(inputs, context_obs, eps, packed, log_std, *,
                     dim_output, dim_lat, dim_h, num_h, act_scale=ACT_SCALE):
    # TODO(synk): 1-D inputs and 3-D inputs/context_obs branches of the torch
    # forward are not implemented; this covers the 2-D/2-D case.
    w_blob, b_blob, layout = packed
    B, dim_input = inputs.shape
    C, d_ctx = context_obs.shape
    rB, rC = _round_up(B, 8), _round_up(C, 8)
    assert dim_output + 1 + 3 * dim_lat <= LANES

    # one packed lane-dense activation slab: inputs | context_obs | eps
    act = jnp.zeros((rB + rC + 8, LANES), jnp.float32)
    act = act.at[0:B, 0:dim_input].set(inputs)
    act = act.at[rB:rB + C, 0:d_ctx].set(context_obs)
    act = act.at[rB + rC, 0:dim_lat].set(eps)

    cfg = (B, C, dim_input, dim_output, dim_lat, dim_h, num_h, d_ctx,
           layout["v_off"], layout["pv_cols"], layout["row_off"], float(act_scale))
    kernel = functools.partial(_parallel_forward_kernel, cfg)
    vmem = pl.BlockSpec(memory_space=pltpu.MemorySpace.VMEM)

    # TODO(synk): for large PPO rollout batches add a 1-D grid over B (blocked
    # activations/outputs, weights resident via a constant index_map,
    # dimension_semantics=("parallel",)); at B~8 a grid is pure overhead.
    slab = pl.pallas_call(
        kernel,
        out_shape=jax.ShapeDtypeStruct((rB, LANES), jnp.float32),
        in_specs=[vmem, vmem, vmem],
        out_specs=vmem,
    )(act, w_blob, b_blob)

    o_v = dim_output
    o_mup = o_v + 1
    o_lv = o_mup + dim_lat
    o_zp = o_lv + dim_lat
    mu = slab[0:B, 0:dim_output]
    v = slab[0:B, o_v:o_v + 1]
    mu_p = slab[0, o_mup:o_mup + dim_lat]
    logvar_p = slab[0, o_lv:o_lv + dim_lat]
    z_p = slab[0, o_zp:o_zp + dim_lat]

    # batch independent -> computed outside the kernel (matches torch source)
    sigma_sq = jnp.exp(jnp.clip(log_std, -10.0, -2.3))
    return mu, sigma_sq, v, mu_p, logvar_p, z_p


# ----------------------------------------------------------------------------
# Pure-JAX reference (f32) for a sanity check
# ----------------------------------------------------------------------------
def reference_forward(inputs, context_obs, eps, p, act_scale=ACT_SCALE):
    h = context_obs
    for i, (w, b) in enumerate(zip(p["ctx_w"], p["ctx_b"])):
        if i > 0:
            h = jnp.maximum(h, 0.0)
        h = h @ w + b
    h = jnp.mean(h, axis=0)
    mu_p = h @ p["mu_net_w"] + p["mu_net_b"]
    logvar_p = h @ p["lv_net_w"] + p["lv_net_b"]
    z_p = mu_p + eps * jnp.exp(0.5 * logvar_p)
    rel = jnp.concatenate(
        [inputs, jnp.broadcast_to(z_p, (inputs.shape[0], z_p.shape[0]))], axis=-1)
    x = jnp.maximum(rel @ p["p_fc1_w"] + p["p_fc1_b"], 0.0)
    x = jnp.tanh(x @ p["p_fc2_w"] + p["p_fc2_b"])
    mu = act_scale * jnp.tanh(x @ p["mu_w"] + p["mu_b"])
    sigma_sq = jnp.exp(jnp.clip(p["log_std"], -10.0, -2.3))
    xv = jnp.maximum(rel @ p["v_fc1_w"] + p["v_fc1_b"], 0.0)
    xv = jnp.tanh(xv @ p["v_fc2_w"] + p["v_fc2_b"])
    v = xv @ p["v_w"] + p["v_b"]
    return mu, sigma_sq, v, mu_p, logvar_p, z_p


if __name__ == "__main__":
    dim_input, dim_output = 16, 4
    dim_obs_x, dim_obs_y = 8, 8
    dim_lat, dim_h, num_h = 8, 32, 2
    B, C = 8, 8

    key = jax.random.PRNGKey(0)
    k_in, k_ctx, k_eps, k_par = jax.random.split(key, 4)
    inputs = jax.random.normal(k_in, (B, dim_input), jnp.float32)
    context_obs = jax.random.normal(k_ctx, (C, dim_obs_x + dim_obs_y), jnp.float32)
    eps = jax.random.normal(k_eps, (dim_lat,), jnp.float32)  # torch.randn_like(std)

    params = init_params(key=k_par, dim_input=dim_input, dim_output=dim_output,
                         dim_obs_x=dim_obs_x, dim_obs_y=dim_obs_y,
                         dim_lat=dim_lat, dim_h=dim_h, num_h=num_h)
    packed = pack_params(params, dim_input, dim_output, dim_lat, dim_h, num_h,
                         dim_obs_x + dim_obs_y)

    outs = parallel_forward(inputs, context_obs, eps, packed, params["log_std"],
                            dim_output=dim_output, dim_lat=dim_lat,
                            dim_h=dim_h, num_h=num_h)
    outs = jax.block_until_ready(outs)
    mu, sigma_sq, v, mu_p, logvar_p, z_p = outs

    assert mu.shape == (B, dim_output)
    assert sigma_sq.shape == (dim_output,)
    assert v.shape == (B, 1)
    assert mu_p.shape == (dim_lat,)
    assert logvar_p.shape == (dim_lat,)
    assert z_p.shape == (dim_lat,)

    ref = reference_forward(inputs, context_obs, eps, params)
    for got, want in zip(outs, ref):
        err = float(jnp.max(jnp.abs(got - want)))
        assert jnp.allclose(got, want, atol=5e-2, rtol=5e-2), err

    print("KERNEL_OK")
</pallas_src>

<mosaic_0001>
module attributes {stable_mosaic.version = 11 : i64} {
  func.func @_parallel_forward_kernel(%arg0: memref<24x128xf32, #tpu.memory_space<vmem>>, %arg1: memref<992x640xbf16, #tpu.memory_space<vmem>>, %arg2: memref<16x640xf32, #tpu.memory_space<vmem>>, %arg3: memref<8x128xf32, #tpu.memory_space<vmem>>) attributes {dimension_semantics = [], scalar_prefetch = 0 : i64, scratch_operands = 0 : i64, tpu.core_type = #tpu.core_type<tc>} {
    %c0 = arith.constant 0 : index
    %c0_0 = arith.constant 0 : index
    %0 = vector.load %arg0[%c0, %c0_0] : memref<24x128xf32, #tpu.memory_space<vmem>>, vector<8x16xf32>
    %c8 = arith.constant 8 : index
    %c0_1 = arith.constant 0 : index
    %1 = vector.load %arg0[%c8, %c0_1] : memref<24x128xf32, #tpu.memory_space<vmem>>, vector<8x16xf32>
    %c16 = arith.constant 16 : index
    %c0_2 = arith.constant 0 : index
    %2 = vector.load %arg0[%c16, %c0_2] : memref<24x128xf32, #tpu.memory_space<vmem>>, vector<1x8xf32>
    %c0_3 = arith.constant 0 : index
    %c0_4 = arith.constant 0 : index
    %3 = vector.load %arg1[%c0_3, %c0_4] : memref<992x640xbf16, #tpu.memory_space<vmem>>, vector<16x32xbf16>
    %4 = arith.truncf %1 : vector<8x16xf32> to vector<8x16xbf16>
    %cst = arith.constant dense<0.000000e+00> : vector<8x32xf32>
    %5 = tpu.matmul %4, %3, %cst {dimension_numbers = #tpu.dot_dimension_numbers<[1], [0], [0], [1], [0, 0, 1, 1], [], []>} : vector<8x16xbf16>, vector<16x32xbf16>, vector<8x32xf32> -> vector<8x32xf32>
    %c0_5 = arith.constant 0 : index
    %c0_6 = arith.constant 0 : index
    %6 = vector.load %arg2[%c0_5, %c0_6] : memref<16x640xf32, #tpu.memory_space<vmem>>, vector<1x32xf32>
    %7 = vector.broadcast %6 : vector<1x32xf32> to vector<8x32xf32>
    %8 = arith.addf %5, %7 : vector<8x32xf32>
    %cst_7 = arith.constant 0.000000e+00 : f32
    %9 = vector.broadcast %cst_7 : f32 to vector<8x32xf32>
    %10 = arith.maximumf %8, %9 : vector<8x32xf32>
    %c16_8 = arith.constant 16 : index
    %c0_9 = arith.constant 0 : index
    %11 = vector.load %arg1[%c16_8, %c0_9] : memref<992x640xbf16, #tpu.memory_space<vmem>>, vector<32x32xbf16>
    %12 = arith.truncf %10 : vector<8x32xf32> to vector<8x32xbf16>
    %cst_10 = arith.constant dense<0.000000e+00> : vector<8x32xf32>
    %13 = tpu.matmul %12, %11, %cst_10 {dimension_numbers = #tpu.dot_dimension_numbers<[1], [0], [0], [1], [0, 0, 1, 1], [], []>} : vector<8x32xbf16>, vector<32x32xbf16>, vector<8x32xf32> -> vector<8x32xf32>
    %c1 = arith.constant 1 : index
    %c0_11 = arith.constant 0 : index
    %14 = vector.load %arg2[%c1, %c0_11] : memref<16x640xf32, #tpu.memory_space<vmem>>, vector<1x32xf32>
    %15 = vector.broadcast %14 : vector<1x32xf32> to vector<8x32xf32>
    %16 = arith.addf %13, %15 : vector<8x32xf32>
    %cst_12 = arith.constant 0.000000e+00 : f32
    %17 = vector.broadcast %cst_12 : f32 to vector<8x32xf32>
    %18 = arith.maximumf %16, %17 : vector<8x32xf32>
    %c48 = arith.constant 48 : index
    %c0_13 = arith.constant 0 : index
    %19 = vector.load %arg1[%c48, %c0_13] : memref<992x640xbf16, #tpu.memory_space<vmem>>, vector<32x32xbf16>
    %20 = arith.truncf %18 : vector<8x32xf32> to vector<8x32xbf16>
    %cst_14 = arith.constant dense<0.000000e+00> : vector<8x32xf32>
    %21 = tpu.matmul %20, %19, %cst_14 {dimension_numbers = #tpu.dot_dimension_numbers<[1], [0], [0], [1], [0, 0, 1, 1], [], []>} : vector<8x32xbf16>, vector<32x32xbf16>, vector<8x32xf32> -> vector<8x32xf32>
    %c2 = arith.constant 2 : index
    %c0_15 = arith.constant 0 : index
    %22 = vector.load %arg2[%c2, %c0_15] : memref<16x640xf32, #tpu.memory_space<vmem>>, vector<1x32xf32>
    %23 = vector.broadcast %22 : vector<1x32xf32> to vector<8x32xf32>
    %24 = arith.addf %21, %23 : vector<8x32xf32>
    %cst_16 = arith.constant dense<0.000000e+00> : vector<32xf32>
    %25 = vector.multi_reduction <add>, %24, %cst_16 [0] : vector<8x32xf32> to vector<32xf32>
    %26 = vector.shape_cast %25 : vector<32xf32> to vector<1x32xf32>
    %cst_17 = arith.constant 8.000000e+00 : f32
    %27 = vector.broadcast %cst_17 : f32 to vector<1x32xf32>
    %28 = arith.divf %26, %27 : vector<1x32xf32>
    %c80 = arith.constant 80 : index
    %c0_18 = arith.constant 0 : index
    %29 = vector.load %arg1[%c80, %c0_18] : memref<992x640xbf16, #tpu.memory_space<vmem>>, vector<32x16xbf16>
    %30 = arith.truncf %28 : vector<1x32xf32> to vector<1x32xbf16>
    %cst_19 = arith.constant dense<0.000000e+00> : vector<1x16xf32>
    %31 = tpu.matmul %30, %29, %cst_19 {dimension_numbers = #tpu.dot_dimension_numbers<[1], [0], [0], [1], [0, 0, 1, 1], [], []>} : vector<1x32xbf16>, vector<32x16xbf16>, vector<1x16xf32> -> vector<1x16xf32>
    %c3 = arith.constant 3 : index
    %c0_20 = arith.constant 0 : index
    %32 = vector.load %arg2[%c3, %c0_20] : memref<16x640xf32, #tpu.memory_space<vmem>>, vector<1x16xf32>
    %33 = arith.addf %31, %32 : vector<1x16xf32>
    %34 = vector.extract_strided_slice %33 {offsets = [0, 0], sizes = [1, 8], strides = [1, 1]} : vector<1x16xf32> to vector<1x8xf32>
    %35 = vector.extract_strided_slice %33 {offsets = [0, 8], sizes = [1, 8], strides = [1, 1]} : vector<1x16xf32> to vector<1x8xf32>
    %cst_21 = arith.constant 5.000000e-01 : f32
    %36 = vector.broadcast %cst_21 : f32 to vector<1x8xf32>
    %37 = arith.mulf %36, %35 : vector<1x8xf32>
    %38 = math.exp %37 : vector<1x8xf32>
    %39 = arith.mulf %2, %38 : vector<1x8xf32>
    %40 = arith.addf %34, %39 : vector<1x8xf32>
    %c112 = arith.constant 112 : index
    %c0_22 = arith.constant 0 : index
    %41 = vector.load %arg1[%c112, %c0_22] : memref<992x640xbf16, #tpu.memory_space<vmem>>, vector<16x628xbf16>
    %42 = arith.truncf %0 : vector<8x16xf32> to vector<8x16xbf16>
    %cst_23 = arith.constant dense<0.000000e+00> : vector<8x628xf32>
    %43 = tpu.matmul %42, %41, %cst_23 {dimension_numbers = #tpu.dot_dimension_numbers<[1], [0], [0], [1], [0, 0, 1, 1], [], []>} : vector<8x16xbf16>, vector<16x628xbf16>, vector<8x628xf32> -> vector<8x628xf32>
    %c128 = arith.constant 128 : index
    %c0_24 = arith.constant 0 : index
    %44 = vector.load %arg1[%c128, %c0_24] : memref<992x640xbf16, #tpu.memory_space<vmem>>, vector<8x628xbf16>
    %45 = arith.truncf %40 : vector<1x8xf32> to vector<1x8xbf16>
    %cst_25 = arith.constant dense<0.000000e+00> : vector<1x628xf32>
    %46 = tpu.matmul %45, %44, %cst_25 {dimension_numbers = #tpu.dot_dimension_numbers<[1], [0], [0], [1], [0, 0, 1, 1], [], []>} : vector<1x8xbf16>, vector<8x628xbf16>, vector<1x628xf32> -> vector<1x628xf32>
    %47 = vector.broadcast %46 : vector<1x628xf32> to vector<8x628xf32>
    %48 = arith.addf %43, %47 : vector<8x628xf32>
    %c4 = arith.constant 4 : index
    %c0_26 = arith.constant 0 : index
    %49 = vector.load %arg2[%c4, %c0_26] : memref<16x640xf32, #tpu.memory_space<vmem>>, vector<1x628xf32>
    %50 = vector.broadcast %49 : vector<1x628xf32> to vector<8x628xf32>
    %51 = arith.addf %48, %50 : vector<8x628xf32>
    %cst_27 = arith.constant 0.000000e+00 : f32
    %52 = vector.broadcast %cst_27 : f32 to vector<8x628xf32>
    %53 = arith.maximumf %51, %52 : vector<8x628xf32>
    %54 = vector.extract_strided_slice %53 {offsets = [0, 0], sizes = [8, 100], strides = [1, 1]} : vector<8x628xf32> to vector<8x100xf32>
    %55 = vector.extract_strided_slice %53 {offsets = [0, 128], sizes = [8, 500], strides = [1, 1]} : vector<8x628xf32> to vector<8x500xf32>
    %c144 = arith.constant 144 : index
    %c0_28 = arith.constant 0 : index
    %56 = vector.load %arg1[%c144, %c0_28] : memref<992x640xbf16, #tpu.memory_space<vmem>>, vector<100x100xbf16>
    %57 = arith.truncf %54 : vector<8x100xf32> to vector<8x100xbf16>
    %cst_29 = arith.constant dense<0.000000e+00> : vector<8x100xf32>
    %58 = tpu.matmul %57, %56, %cst_29 {dimension_numbers = #tpu.dot_dimension_numbers<[1], [0], [0], [1], [0, 0, 1, 1], [], []>} : vector<8x100xbf16>, vector<100x100xbf16>, vector<8x100xf32> -> vector<8x100xf32>
    %c5 = arith.constant 5 : index
    %c0_30 = arith.constant 0 : index
    %59 = vector.load %arg2[%c5, %c0_30] : memref<16x640xf32, #tpu.memory_space<vmem>>, vector<1x100xf32>
    %60 = vector.broadcast %59 : vector<1x100xf32> to vector<8x100xf32>
    %61 = arith.addf %58, %60 : vector<8x100xf32>
    %62 = math.tanh %61 : vector<8x100xf32>
    %c768 = arith.constant 768 : index
    %c0_31 = arith.constant 0 : index
    %63 = vector.load %arg1[%c768, %c0_31] : memref<992x640xbf16, #tpu.memory_space<vmem>>, vector<100x4xbf16>
    %64 = arith.truncf %62 : vector<8x100xf32> to vector<8x100xbf16>
    %cst_32 = arith.constant dense<0.000000e+00> : vector<8x4xf32>
    %65 = tpu.matmul %64, %63, %cst_32 {dimension_numbers = #tpu.dot_dimension_numbers<[1], [0], [0], [1], [0, 0, 1, 1], [], []>} : vector<8x100xbf16>, vector<100x4xbf16>, vector<8x4xf32> -> vector<8x4xf32>
    %c7 = arith.constant 7 : index
    %c0_33 = arith.constant 0 : index
    %66 = vector.load %arg2[%c7, %c0_33] : memref<16x640xf32, #tpu.memory_space<vmem>>, vector<1x4xf32>
    %67 = vector.broadcast %66 : vector<1x4xf32> to vector<8x4xf32>
    %68 = arith.addf %65, %67 : vector<8x4xf32>
    %69 = math.tanh %68 : vector<8x4xf32>
    %cst_34 = arith.constant 1.000000e+00 : f32
    %70 = vector.broadcast %cst_34 : f32 to vector<8x4xf32>
    %71 = arith.mulf %70, %69 : vector<8x4xf32>
    %c256 = arith.constant 256 : index
    %c0_35 = arith.constant 0 : index
    %72 = vector.load %arg1[%c256, %c0_35] : memref<992x640xbf16, #tpu.memory_space<vmem>>, vector<500x100xbf16>
    %73 = arith.truncf %55 : vector<8x500xf32> to vector<8x500xbf16>
    %cst_36 = arith.constant dense<0.000000e+00> : vector<8x100xf32>
    %74 = tpu.matmul %73, %72, %cst_36 {dimension_numbers = #tpu.dot_dimension_numbers<[1], [0], [0], [1], [0, 0, 1, 1], [], []>} : vector<8x500xbf16>, vector<500x100xbf16>, vector<8x100xf32> -> vector<8x100xf32>
    %c6 = arith.constant 6 : index
    %c0_37 = arith.constant 0 : index
    %75 = vector.load %arg2[%c6, %c0_37] : memref<16x640xf32, #tpu.memory_space<vmem>>, vector<1x100xf32>
    %76 = vector.broadcast %75 : vector<1x100xf32> to vector<8x100xf32>
    %77 = arith.addf %74, %76 : vector<8x100xf32>
    %78 = math.tanh %77 : vector<8x100xf32>
    %c880 = arith.constant 880 : index
    %c0_38 = arith.constant 0 : index
    %79 = vector.load %arg1[%c880, %c0_38] : memref<992x640xbf16, #tpu.memory_space<vmem>>, vector<100x1xbf16>
    %80 = arith.truncf %78 : vector<8x100xf32> to vector<8x100xbf16>
    %cst_39 = arith.constant dense<0.000000e+00> : vector<8x1xf32>
    %81 = tpu.matmul %80, %79, %cst_39 {dimension_numbers = #tpu.dot_dimension_numbers<[1], [0], [0], [1], [0, 0, 1, 1], [], []>} : vector<8x100xbf16>, vector<100x1xbf16>, vector<8x1xf32> -> vector<8x1xf32>
    %c8_40 = arith.constant 8 : index
    %c0_41 = arith.constant 0 : index
    %82 = vector.load %arg2[%c8_40, %c0_41] : memref<16x640xf32, #tpu.memory_space<vmem>>, vector<1x1xf32>
    %83 = vector.broadcast %82 : vector<1x1xf32> to vector<8x1xf32>
    %84 = arith.addf %81, %83 : vector<8x1xf32>
    %cst_42 = arith.constant 0.000000e+00 : f32
    %85 = vector.broadcast %cst_42 : f32 to vector<8x128xf32>
    %c0_43 = arith.constant 0 : index
    %c0_44 = arith.constant 0 : index
    %86 = vector.load %arg3[%c0_43, %c0_44] : memref<8x128xf32, #tpu.memory_space<vmem>>, vector<8x128xf32>
    tpu.vector_store %arg3[%c0_43, %c0_44], %85 {strides = array<i32>} : memref<8x128xf32, #tpu.memory_space<vmem>>, vector<8x128xf32>,
    %c0_45 = arith.constant 0 : index
    %c0_46 = arith.constant 0 : index
    %87 = vector.load %arg3[%c0_45, %c0_46] : memref<8x128xf32, #tpu.memory_space<vmem>>, vector<8x4xf32>
    tpu.vector_store %arg3[%c0_45, %c0_46], %71 {strides = array<i32>} : memref<8x128xf32, #tpu.memory_space<vmem>>, vector<8x4xf32>,
    %c0_47 = arith.constant 0 : index
    %c4_48 = arith.constant 4 : index
    %88 = vector.load %arg3[%c0_47, %c4_48] : memref<8x128xf32, #tpu.memory_space<vmem>>, vector<8x1xf32>
    tpu.vector_store %arg3[%c0_47, %c4_48], %84 {strides = array<i32>} : memref<8x128xf32, #tpu.memory_space<vmem>>, vector<8x1xf32>,
    %c0_49 = arith.constant 0 : index
    %c5_50 = arith.constant 5 : index
    %89 = vector.load %arg3[%c0_49, %c5_50] : memref<8x128xf32, #tpu.memory_space<vmem>>, vector<1x8xf32>
    tpu.vector_store %arg3[%c0_49, %c5_50], %34 {strides = array<i32>} : memref<8x128xf32, #tpu.memory_space<vmem>>, vector<1x8xf32>,
    %c0_51 = arith.constant 0 : index
    %c13 = arith.constant 13 : index
    %90 = vector.load %arg3[%c0_51, %c13] : memref<8x128xf32, #tpu.memory_space<vmem>>, vector<1x8xf32>
    tpu.vector_store %arg3[%c0_51, %c13], %35 {strides = array<i32>} : memref<8x128xf32, #tpu.memory_space<vmem>>, vector<1x8xf32>,
    %c0_52 = arith.constant 0 : index
    %c21 = arith.constant 21 : index
    %91 = vector.load %arg3[%c0_52, %c21] : memref<8x128xf32, #tpu.memory_space<vmem>>, vector<1x8xf32>
    tpu.vector_store %arg3[%c0_52, %c21], %40 {strides = array<i32>} : memref<8x128xf32, #tpu.memory_space<vmem>>, vector<1x8xf32>,
    return
  }
}

</mosaic_0001>

<llo_original>
// kernel: tpu_custom_call.1
$region0: #{tpu_custom_call.1}
  #allocation0 [shape = 'u32[]', space=smem, size = 0x4, offset = 0x4, fixed_abs, tag = 'smem constant byte address 0x4 - core index']
  #allocation1 [shape = 'u32[144,128]{1,0:T(1,128)}', space=vmem, size = 0x12000, scoped, tag = 'internal scratch']
  %s0 = inlined_call_operand.hbm [shape: f32[24,128], index: 0, kind: input, shape index: {}]
  %s1 = inlined_call_operand.hbm [shape: bf16[992,640], index: 1, kind: input, shape index: {}]
  %s2 = inlined_call_operand.hbm [shape: f32[16,640], index: 2, kind: input, shape index: {}]
  %s3 = inlined_call_operand.hbm [shape: f32[8,128], index: 3, kind: output, shape index: {}]
  %s4 = sld [smem:[#allocation0]]
  $region34: #{tpu_custom_call.1} parent=0
    _
  %s6 = ssub.s32 1, %s4
  %s7 = scalar_select 0, %s6, %s4
  $region1: #{tpu_custom_call.1} parent=0
    #allocation2 [shape = 'u8[12288]{0}', space=vmem, size = 0x3000, scoped, tag = 'input window, operand 0, single buffered']
    #allocation3 [shape = 's32[1]{0}', space=sflag, size = 0x4, scoped, tag = 'scoped memory for tpu_custom_call.1']
    #allocation4 [shape = 's32[1]{0}', space=sflag, size = 0x4, scoped, tag = 'scoped memory for tpu_custom_call.1']
    #allocation5 [shape = 'u8[1269760]{0}', space=vmem, size = 0x136000, scoped, tag = 'input window, operand 1, single buffered']
    #allocation6 [shape = 's32[1]{0}', space=sflag, size = 0x4, scoped, tag = 'scoped memory for tpu_custom_call.1']
    #allocation7 [shape = 'u8[40960]{0}', space=vmem, size = 0xa000, scoped, tag = 'input window, operand 2, single buffered']
    #allocation8 [shape = 'u8[4096]{0}', space=vmem, size = 0x1000, scoped, tag = 'output window, operand 0, single buffered']
    %8 = vsyncpa [#allocation3], 0
    %9 = vsyncpa [#allocation6], 0
    %10 = vsyncpa [#allocation4], 0
    // Predicated region
    $region2: #{tpu_custom_call.1} parent=1 // pred_check
      _
    $region3: #{tpu_custom_call.1} parent=1 // pred_check_branch
      %12 = sbr.rel (0) target = $region5
    $region4: #{tpu_custom_call.1} parent=1 // pred_region
      %s14 = ssub.s32 384, 384
      %15 = vsyncadd [#allocation3], %s14
      %s16 = sshll.u32 [#allocation2], 4
      %s17 = int_to_ptr.vmem [resolvable:$true] %s16
      %22 = dma.hbm_to_vmem [thread:$0]  %s0, 384, %s17, [#allocation3], 128, 128, 8
    $region5: #{tpu_custom_call.1} parent=1 // pred_fallthru
      _
    // Predicated region
    $region6: #{tpu_custom_call.1} parent=1 // pred_check
      _
    $region7: #{tpu_custom_call.1} parent=1 // pred_check_branch
      %24 = sbr.rel (0) target = $region9
    $region8: #{tpu_custom_call.1} parent=1 // pred_region
      %s26 = ssub.s32 39680, 39680
      %27 = vsyncadd [#allocation6], %s26
      %s28 = sshll.u32 [#allocation5], 4
      %s29 = int_to_ptr.vmem [resolvable:$true] %s28
      %34 = dma.hbm_to_vmem [thread:$0]  %s1, 39680, %s29, [#allocation6], 320, 320, 20
    $region9: #{tpu_custom_call.1} parent=1 // pred_fallthru
      _
    // Predicated region
    $region10: #{tpu_custom_call.1} parent=1 // pred_check
      _
    $region11: #{tpu_custom_call.1} parent=1 // pred_check_branch
      %36 = sbr.rel (0) target = $region13
    $region12: #{tpu_custom_call.1} parent=1 // pred_region
      %s38 = ssub.s32 1280, 1280
      %39 = vsyncadd [#allocation6], %s38
      %s40 = sshll.u32 [#allocation7], 4
      %s41 = int_to_ptr.vmem [resolvable:$true] %s40
      %46 = dma.hbm_to_vmem [thread:$0]  %s2, 1280, %s41, [#allocation6], 640, 640, 40
    $region13: #{tpu_custom_call.1} parent=1 // pred_fallthru
      _
    // Predicated region
    $region14: #{tpu_custom_call.1} parent=1 // pred_check
      _
    $region15: #{tpu_custom_call.1} parent=1 // pred_check_branch
      %48 = sbr.rel (0) target = $region17
    $region16: #{tpu_custom_call.1} parent=1 // pred_region
      %49 = dma.done [#allocation3], 384
    $region17: #{tpu_custom_call.1} parent=1 // pred_fallthru
      _
    // Predicated region
    $region18: #{tpu_custom_call.1} parent=1 // pred_check
      _
    $region19: #{tpu_custom_call.1} parent=1 // pred_check_branch
      %51 = sbr.rel (0) target = $region21
    $region20: #{tpu_custom_call.1} parent=1 // pred_region
      %52 = dma.done [#allocation6], 39680
    $region21: #{tpu_custom_call.1} parent=1 // pred_fallthru
      _
    // Predicated region
    $region22: #{tpu_custom_call.1} parent=1 // pred_check
      _
    $region23: #{tpu_custom_call.1} parent=1 // pred_check_branch
      %54 = sbr.rel (0) target = $region25
    $region24: #{tpu_custom_call.1} parent=1 // pred_region
      %55 = dma.done [#allocation6], 1280
    $region25: #{tpu_custom_call.1} parent=1 // pred_fallthru
      _
    %v57 = vld [vmem:[#allocation2] sm:$0xff]
    %v58 = vld [vmem:[#allocation2 + $0x8] sm:$0xff]
    %v59 = vld [vmem:[#allocation2 + $0x10] sm:$0x1]
    %v60 = vld [vmem:[#allocation5] sm:$0xf]
    %v61 = vld [vmem:[#allocation5 + $0x14] sm:$0xf]
    %v62 = vpack.c.bf16 %v58, %v58
    %v63 = vld [vmem:[#allocation7] ss:$0 sm:$0xff]
    %v66 = vunpack.c.l.b16 %v60
    %v67 = vunpack.c.l.b16 %v61
    %v68 = vpack.c.b16 %v67, %v66
    %vm70 = vcmask 130048
    %v72 = vsel %vm70, %v62, 0
    %74 = vmatprep.subr.bf16.mxu0 0
    %75 = vmatpush1.bf16.msra.mxu0 %v68
    %76 = vmatprep.subr.bf16.mxu0 0
    %77 = vmatpush1.bf16.msra.mxu0 0
    %78 = vmatprep.subr.bf16.mxu0 0
    %79 = vmatpush1.bf16.msra.mxu0 0
    %80 = vmatprep.subr.bf16.mxu0 0
    %81 = vmatpush1.bf16.msra.mxu0 0
    %82 = vmatprep.subr.bf16.mxu0 0
    %83 = vmatpush1.bf16.msra.mxu0 0
    %84 = vmatprep.subr.bf16.mxu0 0
    %85 = vmatpush1.bf16.msra.mxu0 0
    %86 = vmatprep.subr.bf16.mxu0 0
    %87 = vmatpush1.bf16.msra.mxu0 0
    %88 = vmatprep.subr.bf16.mxu0 0
    %89 = vmatpush1.bf16.msra.mxu0 0
    %90 = vmatprep.subr.bf16.mxu0 0
    %91 = vmatpush1.bf16.msra.mxu0 0
    %92 = vmatprep.subr.bf16.mxu0 0
    %93 = vmatpush1.bf16.msra.mxu0 0
    %94 = vmatprep.subr.bf16.mxu0 0
    %95 = vmatpush1.bf16.msra.mxu0 0
    %96 = vmatprep.subr.bf16.mxu0 0
    %97 = vmatpush1.bf16.msra.mxu0 0
    %98 = vmatprep.subr.bf16.mxu0 0
    %99 = vmatpush1.bf16.msra.mxu0 0
    %100 = vmatprep.subr.bf16.mxu0 0
    %101 = vmatpush1.bf16.msra.mxu0 0
    %102 = vmatprep.subr.bf16.mxu0 0
    %103 = vmatpush1.bf16.msra.mxu0 0
    %104 = vmatprep.subr.bf16.mxu0 0
    %105 = vmatpush1.bf16.msra.mxu0 0
    %106 = vmatprep.mubr.bf16.mxu0 0
    %107 = vmatmul.mubr.bf16.gmra.mrb[0].mxu0 %v72
    %v108 = vpop.f32.mrb[0].mxu0
    %v109 = vadd.f32 %v63, %v108
    %v110 = vpop.f32.mrb[0].mxu0
    %v111 = vpop.f32.mrb[0].mxu0
    %v112 = vpop.f32.mrb[0].mxu0
    %113 = vdwg.mxu0
    %v114 = vmax.f32 %v109, 0.0
    %v115 = vld [vmem:[#allocation5 + $0x28] sm:$0xf]
    %v116 = vld [vmem:[#allocation5 + $0x3c] sm:$0xf]
    %v117 = vld [vmem:[#allocation5 + $0x50] sm:$0xf]
    %v118 = vld [vmem:[#allocation5 + $0x64] sm:$0xf]
    %v119 = vpack.c.bf16 %v114, %v114
    %v120 = vld [vmem:[#allocation7 + $0x1] ss:$0 sm:$0xff]
    %v125 = vunpack.c.l.b16 %v115
    %v126 = vunpack.c.l.b16 %v116
    %v127 = vunpack.c.l.b16 %v117
    %v128 = vunpack.c.l.b16 %v118
    %v129 = vpack.c.b16 %v126, %v125
    %v130 = vpack.c.b16 %v128, %v127
    %vm133 = vcmask 261120
    %v135 = vsel %vm133, %v119, 0
    %137 = vmatprep.subr.bf16.mxu0 0
    %138 = vmatpush1.bf16.msra.mxu0 %v129
    %139 = vmatprep.subr.bf16.mxu0 0
    %140 = vmatpush1.bf16.msra.mxu0 %v130
    %141 = vmatprep.subr.bf16.mxu0 0
    %142 = vmatpush1.bf16.msra.mxu0 0
    %143 = vmatprep.subr.bf16.mxu0 0
    %144 = vmatpush1.bf16.msra.mxu0 0
    %145 = vmatprep.subr.bf16.mxu0 0
    %146 = vmatpush1.bf16.msra.mxu0 0
    %147 = vmatprep.subr.bf16.mxu0 0
    %148 = vmatpush1.bf16.msra.mxu0 0
    %149 = vmatprep.subr.bf16.mxu0 0
    %150 = vmatpush1.bf16.msra.mxu0 0
    %151 = vmatprep.subr.bf16.mxu0 0
    %152 = vmatpush1.bf16.msra.mxu0 0
    %153 = vmatprep.subr.bf16.mxu0 0
    %154 = vmatpush1.bf16.msra.mxu0 0
    %155 = vmatprep.subr.bf16.mxu0 0
    %156 = vmatpush1.bf16.msra.mxu0 0
    %157 = vmatprep.subr.bf16.mxu0 0
    %158 = vmatpush1.bf16.msra.mxu0 0
    %159 = vmatprep.subr.bf16.mxu0 0
    %160 = vmatpush1.bf16.msra.mxu0 0
    %161 = vmatprep.subr.bf16.mxu0 0
    %162 = vmatpush1.bf16.msra.mxu0 0
    %163 = vmatprep.subr.bf16.mxu0 0
    %164 = vmatpush1.bf16.msra.mxu0 0
    %165 = vmatprep.subr.bf16.mxu0 0
    %166 = vmatpush1.bf16.msra.mxu0 0
    %167 = vmatprep.subr.bf16.mxu0 0
    %168 = vmatpush1.bf16.msra.mxu0 0
    %169 = vmatprep.mubr.bf16.mxu0 0
    %170 = vmatmul.mubr.bf16.gmra.mrb[0].mxu0 %v135
    %v171 = vpop.f32.mrb[0].mxu0
    %v172 = vadd.f32 %v120, %v171
    %v173 = vpop.f32.mrb[0].mxu0
    %v174 = vpop.f32.mrb[0].mxu0
    %v175 = vpop.f32.mrb[0].mxu0
    %176 = vdwg.mxu0
    %v177 = vmax.f32 %v172, 0.0
    %v178 = vld [vmem:[#allocation5 + $0x78] sm:$0xf]
    %v179 = vld [vmem:[#allocation5 + $0x8c] sm:$0xf]
    %v180 = vld [vmem:[#allocation5 + $0xa0] sm:$0xf]
    %v181 = vld [vmem:[#allocation5 + $0xb4] sm:$0xf]
    %v182 = vpack.c.bf16 %v177, %v177
    %v183 = vld [vmem:[#allocation7 + $0x2] ss:$0 sm:$0xff]
    %v188 = vunpack.c.l.b16 %v178
    %v189 = vunpack.c.l.b16 %v179
    %v190 = vunpack.c.l.b16 %v180
    %v191 = vunpack.c.l.b16 %v181
    %v192 = vpack.c.b16 %v189, %v188
    %v193 = vpack.c.b16 %v191, %v190
    %v197 = vsel %vm133, %v182, 0
    %199 = vmatprep.subr.bf16.mxu0 0
    %200 = vmatpush1.bf16.msra.mxu0 %v192
    %201 = vmatprep.subr.bf16.mxu0 0
    %202 = vmatpush1.bf16.msra.mxu0 %v193
    %203 = vmatprep.subr.bf16.mxu0 0
    %204 = vmatpush1.bf16.msra.mxu0 0
    %205 = vmatprep.subr.bf16.mxu0 0
    %206 = vmatpush1.bf16.msra.mxu0 0
    %207 = vmatprep.subr.bf16.mxu0 0
    %208 = vmatpush1.bf16.msra.mxu0 0
    %209 = vmatprep.subr.bf16.mxu0 0
    %210 = vmatpush1.bf16.msra.mxu0 0
    %211 = vmatprep.subr.bf16.mxu0 0
    %212 = vmatpush1.bf16.msra.mxu0 0
    %213 = vmatprep.subr.bf16.mxu0 0
    %214 = vmatpush1.bf16.msra.mxu0 0
    %215 = vmatprep.subr.bf16.mxu0 0
    %216 = vmatpush1.bf16.msra.mxu0 0
    %217 = vmatprep.subr.bf16.mxu0 0
    %218 = vmatpush1.bf16.msra.mxu0 0
    %219 = vmatprep.subr.bf16.mxu0 0
    %220 = vmatpush1.bf16.msra.mxu0 0
    %221 = vmatprep.subr.bf16.mxu0 0
    %222 = vmatpush1.bf16.msra.mxu0 0
    %223 = vmatprep.subr.bf16.mxu0 0
    %224 = vmatpush1.bf16.msra.mxu0 0
    %225 = vmatprep.subr.bf16.mxu0 0
    %226 = vmatpush1.bf16.msra.mxu0 0
    %227 = vmatprep.subr.bf16.mxu0 0
    %228 = vmatpush1.bf16.msra.mxu0 0
    %229 = vmatprep.subr.bf16.mxu0 0
    %230 = vmatpush1.bf16.msra.mxu0 0
    %231 = vmatprep.mubr.bf16.mxu0 0
    %232 = vmatmul.mubr.bf16.gmra.mrb[0].mxu0 %v197
    %v233 = vpop.f32.mrb[0].mxu0
    %v234 = vadd.f32 %v183, %v233
    %v235 = vpop.f32.mrb[0].mxu0
    %v236 = vpop.f32.mrb[0].mxu0
    %v237 = vpop.f32.mrb[0].mxu0
    %238 = vdwg.mxu0
    %v239 = vsel %vm133, %v234, 0.0
    %v240 = vrot.slane %v239, 4
    %v241 = vadd.f32 %v239, %v240
    %v242 = vrot.slane %v241, 2
    %v243 = vadd.f32 %v241, %v242
    %v244 = vrot.slane %v243, 1
    %v245 = vadd.f32 %v243, %v244
    %v246 = vrcp.pop 8.0
    %v247 = vmul.f32 %v245, %v246
    %v248 = vld [vmem:[#allocation5 + $0xc8] sm:$0xf]
    %v249 = vld [vmem:[#allocation5 + $0xdc] sm:$0xf]
    %v250 = vld [vmem:[#allocation5 + $0xf0] sm:$0xf]
    %v251 = vld [vmem:[#allocation5 + $0x104] sm:$0xf]
    %v252 = vpack.c.bf16 %v247, %v247
    %v253 = vld [vmem:[#allocation7 + $0x3] ss:$0 sm:$0xff]
    %v258 = vunpack.c.l.b16 %v248
    %v259 = vunpack.c.l.b16 %v249
    %v260 = vunpack.c.l.b16 %v250
    %v261 = vunpack.c.l.b16 %v251
    %v262 = vpack.c.b16 %v259, %v258
    %v263 = vpack.c.b16 %v261, %v260
    %v267 = vsel %vm133, %v252, 0
    %269 = vmatprep.subr.bf16.mxu0 0
    %270 = vmatpush1.bf16.msra.mxu0 %v262
    %271 = vmatprep.subr.bf16.mxu0 0
    %272 = vmatpush1.bf16.msra.mxu0 %v263
    %273 = vmatprep.subr.bf16.mxu0 0
    %274 = vmatpush1.bf16.msra.mxu0 0
    %275 = vmatprep.subr.bf16.mxu0 0
    %276 = vmatpush1.bf16.msra.mxu0 0
    %277 = vmatprep.subr.bf16.mxu0 0
    %278 = vmatpush1.bf16.msra.mxu0 0
    %279 = vmatprep.subr.bf16.mxu0 0
    %280 = vmatpush1.bf16.msra.mxu0 0
    %281 = vmatprep.subr.bf16.mxu0 0
    %282 = vmatpush1.bf16.msra.mxu0 0
    %283 = vmatprep.subr.bf16.mxu0 0
    %284 = vmatpush1.bf16.msra.mxu0 0
    %285 = vmatprep.subr.bf16.mxu0 0
    %286 = vmatpush1.bf16.msra.mxu0 0
    %287 = vmatprep.subr.bf16.mxu0 0
    %288 = vmatpush1.bf16.msra.mxu0 0
    %289 = vmatprep.subr.bf16.mxu0 0
    %290 = vmatpush1.bf16.msra.mxu0 0
    %291 = vmatprep.subr.bf16.mxu0 0
    %292 = vmatpush1.bf16.msra.mxu0 0
    %293 = vmatprep.subr.bf16.mxu0 0
    %294 = vmatpush1.bf16.msra.mxu0 0
    %295 = vmatprep.subr.bf16.mxu0 0
    %296 = vmatpush1.bf16.msra.mxu0 0
    %297 = vmatprep.subr.bf16.mxu0 0
    %298 = vmatpush1.bf16.msra.mxu0 0
    %299 = vmatprep.subr.bf16.mxu0 0
    %300 = vmatpush1.bf16.msra.mxu0 0
    %301 = vmatprep.mubr.bf16.mxu0 0
    %302 = vmatmul.mubr.bf16.gmra.mrb[0].mxu0 %v267
    %v303 = vpop.f32.mrb[0].mxu0
    %v304 = vadd.f32 %v253, %v303
    %v305 = vpop.f32.mrb[0].mxu0
    %v306 = vpop.f32.mrb[0].mxu0
    %v307 = vpop.f32.mrb[0].mxu0
    %308 = vdwg.mxu0
    %v309 = vmul.f32 %v304, 0.5
    %v310 = vmul.f32 %v309, 1.442695
    %v311 = vpow.pop %v310
    %313 = vrot.lane.b32.xlu0 %v311, 120
    %v314 = vpop.permute.xlu0 %313
    %v316 = vmul.f32 %v59, %v314
    %v317 = vadd.f32 %v304, %v316
    %v318 = vld [vmem:[#allocation5 + $0x118] sm:$0xff]
    %v319 = vld [vmem:[#allocation5 + $0x120] sm:$0xff]
    %v320 = vld [vmem:[#allocation5 + $0x128] sm:$0xf]
    %v321 = vld [vmem:[#allocation5 + $0x12c] sm:$0xff]
    %v322 = vld [vmem:[#allocation5 + $0x134] sm:$0xff]
    %v323 = vld [vmem:[#allocation5 + $0x13c] sm:$0xf]
    %v324 = vpack.c.bf16 %v57, %v57
    %v325 = vld [vmem:[#allocation5 + $0x140] sm:$0xff]
    %v326 = vld [vmem:[#allocation5 + $0x148] sm:$0xff]
    %v327 = vld [vmem:[#allocation5 + $0x150] sm:$0xf]
    %v328 = vpack.c.bf16 %v317, %v317
    %v332 = vunpack.c.l.b16 %v325
    %v333 = vunpack.c.h.b16 %v325
    %v334 = vunpack.c.l.b16 %v326
    %v335 = vunpack.c.h.b16 %v326
    %v336 = vunpack.c.l.b16 %v327
    %v337 = vpack.c.b16 %v332, %v332
    %v338 = vpack.c.b16 %v333, %v333
    %v339 = vpack.c.b16 %v334, %v334
    %v340 = vpack.c.b16 %v335, %v335
    %v341 = vpack.c.b16 %v336, %v336
    %vm342 = vcmask 64512
    %v344 = vsel %vm342, %v328, 0
    %vm346 = vcmask 1043456
    %v348 = vsel %vm346, %v337, 0
    %v351 = vsel %vm346, %v338, 0
    %v354 = vsel %vm346, %v339, 0
    %v357 = vsel %vm346, %v340, 0
    %v360 = vsel %vm346, %v341, 0
    %362 = vmatprep.subr.bf16.mxu0 %v351
    %363 = vmatpush1.bf16.msra.mxu0 %v348
    %364 = vmatprep.subr.bf16.mxu0 0
    %365 = vmatpush1.bf16.msra.mxu0 0
    %366 = vmatprep.subr.bf16.mxu0 0
    %367 = vmatpush1.bf16.msra.mxu0 0
    %368 = vmatprep.subr.bf16.mxu0 0
    %369 = vmatpush1.bf16.msra.mxu0 0
    %370 = vmatprep.subr.bf16.mxu0 0
    %371 = vmatpush1.bf16.msra.mxu0 0
    %372 = vmatprep.subr.bf16.mxu0 0
    %373 = vmatpush1.bf16.msra.mxu0 0
    %374 = vmatprep.subr.bf16.mxu0 0
    %375 = vmatpush1.bf16.msra.mxu0 0
    %376 = vmatprep.subr.bf16.mxu0 0
    %377 = vmatpush1.bf16.msra.mxu0 0
    %378 = vmatprep.subr.bf16.mxu0 0
    %379 = vmatpush1.bf16.msra.mxu0 0
    %380 = vmatprep.subr.bf16.mxu0 0
    %381 = vmatpush1.bf16.msra.mxu0 0
    %382 = vmatprep.subr.bf16.mxu0 0
    %383 = vmatpush1.bf16.msra.mxu0 0
    %384 = vmatprep.subr.bf16.mxu0 0
    %385 = vmatpush1.bf16.msra.mxu0 0
    %386 = vmatprep.subr.bf16.mxu0 0
    %387 = vmatpush1.bf16.msra.mxu0 0
    %388 = vmatprep.subr.bf16.mxu0 0
    %389 = vmatpush1.bf16.msra.mxu0 0
    %390 = vmatprep.subr.bf16.mxu0 0
    %391 = vmatpush1.bf16.msra.mxu0 0
    %392 = vmatprep.subr.bf16.mxu0 0
    %393 = vmatpush1.bf16.msra.mxu0 0
    %394 = vmatprep.mubr.bf16.mxu0 0
    %395 = vmatmul.mubr.bf16.gmra.mrb[0].mxu0 %v344
    %v396 = vpop.f32.mrb[0].mxu0
    %v397 = vadd.f32 0.0, %v396
    %v398 = vpop.f32.mrb[0].mxu0
    %v399 = vadd.f32 0.0, %v398
    %v400 = vpop.f32.mrb[0].mxu0
    %v401 = vpop.f32.mrb[0].mxu0
    %402 = vdwg.mxu0
    %403 = vmatprep.subr.bf16.mxu0 %v357
    %404 = vmatpush1.bf16.msra.mxu0 %v354
    %405 = vmatprep.subr.bf16.mxu0 0
    %406 = vmatpush1.bf16.msra.mxu0 0
    %407 = vmatprep.subr.bf16.mxu0 0
    %408 = vmatpush1.bf16.msra.mxu0 0
    %409 = vmatprep.subr.bf16.mxu0 0
    %410 = vmatpush1.bf16.msra.mxu0 0
    %411 = vmatprep.subr.bf16.mxu0 0
    %412 = vmatpush1.bf16.msra.mxu0 0
    %413 = vmatprep.subr.bf16.mxu0 0
    %414 = vmatpush1.bf16.msra.mxu0 0
    %415 = vmatprep.subr.bf16.mxu0 0
    %416 = vmatpush1.bf16.msra.mxu0 0
    %417 = vmatprep.subr.bf16.mxu0 0
    %418 = vmatpush1.bf16.msra.mxu0 0
    %419 = vmatprep.subr.bf16.mxu0 0
    %420 = vmatpush1.bf16.msra.mxu0 0
    %421 = vmatprep.subr.bf16.mxu0 0
    %422 = vmatpush1.bf16.msra.mxu0 0
    %423 = vmatprep.subr.bf16.mxu0 0
    %424 = vmatpush1.bf16.msra.mxu0 0
    %425 = vmatprep.subr.bf16.mxu0 0
    %426 = vmatpush1.bf16.msra.mxu0 0
    %427 = vmatprep.subr.bf16.mxu0 0
    %428 = vmatpush1.bf16.msra.mxu0 0
    %429 = vmatprep.subr.bf16.mxu0 0
    %430 = vmatpush1.bf16.msra.mxu0 0
    %431 = vmatprep.subr.bf16.mxu0 0
    %432 = vmatpush1.bf16.msra.mxu0 0
    %433 = vmatprep.subr.bf16.mxu0 0
    %434 = vmatpush1.bf16.msra.mxu0 0
    %435 = vmatprep.mubr.bf16.mxu0 0
    %436 = vmatmul.mubr.bf16.gmra.mrb[0].mxu0 %v344
    %v437 = vpop.f32.mrb[0].mxu0
    %v438 = vadd.f32 0.0, %v437
    %v439 = vpop.f32.mrb[0].mxu0
    %v440 = vadd.f32 0.0, %v439
    %v441 = vpop.f32.mrb[0].mxu0
    %v442 = vpop.f32.mrb[0].mxu0
    %443 = vdwg.mxu0
    %444 = vmatprep.subr.bf16.mxu0 0
    %445 = vmatpush1.bf16.msra.mxu0 %v360
    %446 = vmatprep.subr.bf16.mxu0 0
    %447 = vmatpush1.bf16.msra.mxu0 0
    %448 = vmatprep.subr.bf16.mxu0 0
    %449 = vmatpush1.bf16.msra.mxu0 0
    %450 = vmatprep.subr.bf16.mxu0 0
    %451 = vmatpush1.bf16.msra.mxu0 0
    %452 = vmatprep.subr.bf16.mxu0 0
    %453 = vmatpush1.bf16.msra.mxu0 0
    %454 = vmatprep.subr.bf16.mxu0 0
    %455 = vmatpush1.bf16.msra.mxu0 0
    %456 = vmatprep.subr.bf16.mxu0 0
    %457 = vmatpush1.bf16.msra.mxu0 0
    %458 = vmatprep.subr.bf16.mxu0 0
    %459 = vmatpush1.bf16.msra.mxu0 0
    %460 = vmatprep.subr.bf16.mxu0 0
    %461 = vmatpush1.bf16.msra.mxu0 0
    %462 = vmatprep.subr.bf16.mxu0 0
    %463 = vmatpush1.bf16.msra.mxu0 0
    %464 = vmatprep.subr.bf16.mxu0 0
    %465 = vmatpush1.bf16.msra.mxu0 0
    %466 = vmatprep.subr.bf16.mxu0 0
    %467 = vmatpush1.bf16.msra.mxu0 0
    %468 = vmatprep.subr.bf16.mxu0 0
    %469 = vmatpush1.bf16.msra.mxu0 0
    %470 = vmatprep.subr.bf16.mxu0 0
    %471 = vmatpush1.bf16.msra.mxu0 0
    %472 = vmatprep.subr.bf16.mxu0 0
    %473 = vmatpush1.bf16.msra.mxu0 0
    %474 = vmatprep.subr.bf16.mxu0 0
    %475 = vmatpush1.bf16.msra.mxu0 0
    %476 = vmatprep.mubr.bf16.mxu0 0
    %477 = vmatmul.mubr.bf16.gmra.mrb[0].mxu0 %v344
    %v478 = vpop.f32.mrb[0].mxu0
    %v479 = vadd.f32 0.0, %v478
    %v480 = vpop.f32.mrb[0].mxu0
    %v481 = vpop.f32.mrb[0].mxu0
    %v482 = vpop.f32.mrb[0].mxu0
    %483 = vdwg.mxu0
    %v484 = vlaneseq
    %v485 = vshrl.u32 %v484, 7
    %v486 = vsub.s32 0, %v485
    %v487 = vrot.slane %v397, %v486
    %v488 = vlaneseq
    %v489 = vshrl.u32 %v488, 7
    %v490 = vsub.s32 0, %v489
    %v491 = vrot.slane %v399, %v490
    %v492 = vlaneseq
    %v493 = vshrl.u32 %v492, 7
    %v494 = vsub.s32 0, %v493
    %v495 = vrot.slane %v438, %v494
    %v496 = vlaneseq
    %v497 = vshrl.u32 %v496, 7
    %v498 = vsub.s32 0, %v497
    %v499 = vrot.slane %v440, %v498
    %v500 = vlaneseq
    %v501 = vshrl.u32 %v500, 7
    %v502 = vsub.s32 0, %v501
    %v503 = vrot.slane %v479, %v502
    %v510 = vunpack.c.l.b16 %v318
    %v511 = vunpack.c.h.b16 %v318
    %v512 = vunpack.c.l.b16 %v319
    %v513 = vunpack.c.h.b16 %v319
    %v514 = vunpack.c.l.b16 %v320
    %v515 = vunpack.c.l.b16 %v321
    %v516 = vunpack.c.h.b16 %v321
    %v517 = vunpack.c.l.b16 %v322
    %v518 = vunpack.c.h.b16 %v322
    %v519 = vunpack.c.l.b16 %v323
    %v520 = vpack.c.b16 %v515, %v510
    %v521 = vpack.c.b16 %v516, %v511
    %v522 = vpack.c.b16 %v517, %v512
    %v523 = vpack.c.b16 %v518, %v513
    %v524 = vpack.c.b16 %v519, %v514
    %v531 = vsel %vm70, %v324, 0
    %533 = vmatprep.subr.bf16.mxu0 %v521
    %534 = vmatpush1.bf16.msra.mxu0 %v520
    %535 = vmatprep.subr.bf16.mxu0 0
    %536 = vmatpush1.bf16.msra.mxu0 0
    %537 = vmatprep.subr.bf16.mxu0 0
    %538 = vmatpush1.bf16.msra.mxu0 0
    %539 = vmatprep.subr.bf16.mxu0 0
    %540 = vmatpush1.bf16.msra.mxu0 0
    %541 = vmatprep.subr.bf16.mxu0 0
    %542 = vmatpush1.bf16.msra.mxu0 0
    %543 = vmatprep.subr.bf16.mxu0 0
    %544 = vmatpush1.bf16.msra.mxu0 0
    %545 = vmatprep.subr.bf16.mxu0 0
    %546 = vmatpush1.bf16.msra.mxu0 0
    %547 = vmatprep.subr.bf16.mxu0 0
    %548 = vmatpush1.bf16.msra.mxu0 0
    %549 = vmatprep.subr.bf16.mxu0 0
    %550 = vmatpush1.bf16.msra.mxu0 0
    %551 = vmatprep.subr.bf16.mxu0 0
    %552 = vmatpush1.bf16.msra.mxu0 0
    %553 = vmatprep.subr.bf16.mxu0 0
    %554 = vmatpush1.bf16.msra.mxu0 0
    %555 = vmatprep.subr.bf16.mxu0 0
    %556 = vmatpush1.bf16.msra.mxu0 0
    %557 = vmatprep.subr.bf16.mxu0 0
    %558 = vmatpush1.bf16.msra.mxu0 0
    %559 = vmatprep.subr.bf16.mxu0 0
    %560 = vmatpush1.bf16.msra.mxu0 0
    %561 = vmatprep.subr.bf16.mxu0 0
    %562 = vmatpush1.bf16.msra.mxu0 0
    %563 = vmatprep.subr.bf16.mxu0 0
    %564 = vmatpush1.bf16.msra.mxu0 0
    %565 = vmatprep.mubr.bf16.mxu0 0
    %566 = vmatmul.mubr.bf16.gmra.mrb[0].mxu0 %v531
    %v567 = vpop.f32.mrb[0].mxu0
    %v568 = vadd.f32 %v487, %v567
    %v569 = vpop.f32.mrb[0].mxu0
    %v570 = vadd.f32 %v491, %v569
    %v571 = vpop.f32.mrb[0].mxu0
    %v572 = vpop.f32.mrb[0].mxu0
    %573 = vdwg.mxu0
    %574 = vmatprep.subr.bf16.mxu0 %v523
    %575 = vmatpush1.bf16.msra.mxu0 %v522
    %576 = vmatprep.subr.bf16.mxu0 0
    %577 = vmatpush1.bf16.msra.mxu0 0
    %578 = vmatprep.subr.bf16.mxu0 0
    %579 = vmatpush1.bf16.msra.mxu0 0
    %580 = vmatprep.subr.bf16.mxu0 0
    %581 = vmatpush1.bf16.msra.mxu0 0
    %582 = vmatprep.subr.bf16.mxu0 0
    %583 = vmatpush1.bf16.msra.mxu0 0
    %584 = vmatprep.subr.bf16.mxu0 0
    %585 = vmatpush1.bf16.msra.mxu0 0
    %586 = vmatprep.subr.bf16.mxu0 0
    %587 = vmatpush1.bf16.msra.mxu0 0
    %588 = vmatprep.subr.bf16.mxu0 0
    %589 = vmatpush1.bf16.msra.mxu0 0
    %590 = vmatprep.subr.bf16.mxu0 0
    %591 = vmatpush1.bf16.msra.mxu0 0
    %592 = vmatprep.subr.bf16.mxu0 0
    %593 = vmatpush1.bf16.msra.mxu0 0
    %594 = vmatprep.subr.bf16.mxu0 0
    %595 = vmatpush1.bf16.msra.mxu0 0
    %596 = vmatprep.subr.bf16.mxu0 0
    %597 = vmatpush1.bf16.msra.mxu0 0
    %598 = vmatprep.subr.bf16.mxu0 0
    %599 = vmatpush1.bf16.msra.mxu0 0
    %600 = vmatprep.subr.bf16.mxu0 0
    %601 = vmatpush1.bf16.msra.mxu0 0
    %602 = vmatprep.subr.bf16.mxu0 0
    %603 = vmatpush1.bf16.msra.mxu0 0
    %604 = vmatprep.subr.bf16.mxu0 0
    %605 = vmatpush1.bf16.msra.mxu0 0
    %606 = vmatprep.mubr.bf16.mxu0 0
    %607 = vmatmul.mubr.bf16.gmra.mrb[0].mxu0 %v531
    %v608 = vpop.f32.mrb[0].mxu0
    %v609 = vadd.f32 %v495, %v608
    %v610 = vpop.f32.mrb[0].mxu0
    %v611 = vadd.f32 %v499, %v610
    %v612 = vpop.f32.mrb[0].mxu0
    %v613 = vpop.f32.mrb[0].mxu0
    %614 = vdwg.mxu0
    %615 = vmatprep.subr.bf16.mxu0 0
    %616 = vmatpush1.bf16.msra.mxu0 %v524
    %617 = vmatprep.subr.bf16.mxu0 0
    %618 = vmatpush1.bf16.msra.mxu0 0
    %619 = vmatprep.subr.bf16.mxu0 0
    %620 = vmatpush1.bf16.msra.mxu0 0
    %621 = vmatprep.subr.bf16.mxu0 0
    %622 = vmatpush1.bf16.msra.mxu0 0
    %623 = vmatprep.subr.bf16.mxu0 0
    %624 = vmatpush1.bf16.msra.mxu0 0
    %625 = vmatprep.subr.bf16.mxu0 0
    %626 = vmatpush1.bf16.msra.mxu0 0
    %627 = vmatprep.subr.bf16.mxu0 0
    %628 = vmatpush1.bf16.msra.mxu0 0
    %629 = vmatprep.subr.bf16.mxu0 0
    %630 = vmatpush1.bf16.msra.mxu0 0
    %631 = vmatprep.subr.bf16.mxu0 0
    %632 = vmatpush1.bf16.msra.mxu0 0
    %633 = vmatprep.subr.bf16.mxu0 0
    %634 = vmatpush1.bf16.msra.mxu0 0
    %635 = vmatprep.subr.bf16.mxu0 0
    %636 = vmatpush1.bf16.msra.mxu0 0
    %637 = vmatprep.subr.bf16.mxu0 0
    %638 = vmatpush1.bf16.msra.mxu0 0
    %639 = vmatprep.subr.bf16.mxu0 0
    %640 = vmatpush1.bf16.msra.mxu0 0
    %641 = vmatprep.subr.bf16.mxu0 0
    %642 = vmatpush1.bf16.msra.mxu0 0
    %643 = vmatprep.subr.bf16.mxu0 0
    %644 = vmatpush1.bf16.msra.mxu0 0
    %645 = vmatprep.subr.bf16.mxu0 0
    %646 = vmatpush1.bf16.msra.mxu0 0
    %647 = vmatprep.mubr.bf16.mxu0 0
    %648 = vmatmul.mubr.bf16.gmra.mrb[0].mxu0 %v531
    %v649 = vpop.f32.mrb[0].mxu0
    %v650 = vadd.f32 %v503, %v649
    %v651 = vpop.f32.mrb[0].mxu0
    %v652 = vpop.f32.mrb[0].mxu0
    %v653 = vpop.f32.mrb[0].mxu0
    %654 = vdwg.mxu0
    %s655 = scalar_lea.vmem [#allocation7], 4
    %v656 = vld [vmem:[%s655] ss:$8 sm:$0xf]
    %v657 = vld [vmem:[%s655] ss:$8 sm:$0x10]
    %v658 = vor.u32 %v656, %v657
    %v660 = vlaneseq
    %v661 = vshrl.u32 %v660, 7
    %v662 = vsub.s32 0, %v661
    %v663 = vrot.slane %v658, %v662
    %v664 = vlaneseq
    %v665 = vshrl.u32 %v664, 7
    %v666 = vsub.s32 1, %v665
    %v667 = vrot.slane %v658, %v666
    %v668 = vlaneseq
    %v669 = vshrl.u32 %v668, 7
    %v670 = vsub.s32 2, %v669
    %v671 = vrot.slane %v658, %v670
    %v672 = vlaneseq
    %v673 = vshrl.u32 %v672, 7
    %v674 = vsub.s32 3, %v673
    %v675 = vrot.slane %v658, %v674
    %v676 = vlaneseq
    %v677 = vshrl.u32 %v676, 7
    %v678 = vsub.s32 4, %v677
    %v679 = vrot.slane %v658, %v678
    %v685 = vadd.f32 %v568, %v663
    %v686 = vadd.f32 %v570, %v667
    %v687 = vadd.f32 %v609, %v671
    %v688 = vadd.f32 %v611, %v675
    %v689 = vadd.f32 %v650, %v679
    %v690 = vmax.f32 %v685, 0.0
    %v691 = vmax.f32 %v686, 0.0
    %v692 = vmax.f32 %v687, 0.0
    %v693 = vmax.f32 %v688, 0.0
    %v694 = vmax.f32 %v689, 0.0
    %v695 = vld [vmem:[#allocation5 + $0x168] sm:$0xf]
    %v696 = vld [vmem:[#allocation5 + $0x17c] sm:$0xf]
    %v697 = vld [vmem:[#allocation5 + $0x190] sm:$0xf]
    %v698 = vld [vmem:[#allocation5 + $0x1a4] sm:$0xf]
    %v699 = vld [vmem:[#allocation5 + $0x1b8] sm:$0xf]
    %v700 = vld [vmem:[#allocation5 + $0x1cc] sm:$0xf]
    %v701 = vld [vmem:[#allocation5 + $0x1e0] sm:$0xf]
    %v702 = vld [vmem:[#allocation5 + $0x1f4] sm:$0xf]
    %v703 = vld [vmem:[#allocation5 + $0x208] sm:$0xf]
    %v704 = vld [vmem:[#allocation5 + $0x21c] sm:$0xf]
    %v705 = vld [vmem:[#allocation5 + $0x230] sm:$0xf]
    %v706 = vld [vmem:[#allocation5 + $0x244] sm:$0xf]
    %v707 = vld [vmem:[#allocation5 + $0x258] sm:$0x3]
    %v708 = vpack.c.bf16 %v690, %v690
    %v709 = vld [vmem:[#allocation7 + $0x5] ss:$0 sm:$0xff]
    %v723 = vunpack.c.l.b16 %v695
    %v724 = vunpack.c.l.b16 %v696
    %v725 = vunpack.c.l.b16 %v697
    %v726 = vunpack.c.l.b16 %v698
    %v727 = vunpack.c.l.b16 %v699
    %v728 = vunpack.c.l.b16 %v700
    %v729 = vunpack.c.l.b16 %v701
    %v730 = vunpack.c.l.b16 %v702
    %v731 = vunpack.c.l.b16 %v703
    %v732 = vunpack.c.l.b16 %v704
    %v733 = vunpack.c.l.b16 %v705
    %v734 = vunpack.c.l.b16 %v706
    %v735 = vunpack.c.l.b16 %v707
    %v736 = vpack.c.b16 %v724, %v723
    %v737 = vpack.c.b16 %v726, %v725
    %v738 = vpack.c.b16 %v728, %v727
    %v739 = vpack.c.b16 %v730, %v729
    %v740 = vpack.c.b16 %v732, %v731
    %v741 = vpack.c.b16 %v734, %v733
    %v742 = vpack.c.b16 %v735, %v735
    %vm749 = vcmask 818176
    %v751 = vsel %vm749, %v708, 0
    %vm753 = vcmask 1041408
    %v755 = vsel %vm753, %v742, 0
    %757 = vmatprep.subr.bf16.mxu0 0
    %758 = vmatpush1.bf16.msra.mxu0 %v736
    %759 = vmatprep.subr.bf16.mxu0 0
    %760 = vmatpush1.bf16.msra.mxu0 %v737
    %761 = vmatprep.subr.bf16.mxu0 0
    %762 = vmatpush1.bf16.msra.mxu0 %v738
    %763 = vmatprep.subr.bf16.mxu0 0
    %764 = vmatpush1.bf16.msra.mxu0 %v739
    %765 = vmatprep.subr.bf16.mxu0 0
    %766 = vmatpush1.bf16.msra.mxu0 %v740
    %767 = vmatprep.subr.bf16.mxu0 0
    %768 = vmatpush1.bf16.msra.mxu0 %v741
    %769 = vmatprep.subr.bf16.mxu0 0
    %770 = vmatpush1.bf16.msra.mxu0 %v755
    %771 = vmatprep.subr.bf16.mxu0 0
    %772 = vmatpush1.bf16.msra.mxu0 0
    %773 = vmatprep.subr.bf16.mxu0 0
    %774 = vmatpush1.bf16.msra.mxu0 0
    %775 = vmatprep.subr.bf16.mxu0 0
    %776 = vmatpush1.bf16.msra.mxu0 0
    %777 = vmatprep.subr.bf16.mxu0 0
    %778 = vmatpush1.bf16.msra.mxu0 0
    %779 = vmatprep.subr.bf16.mxu0 0
    %780 = vmatpush1.bf16.msra.mxu0 0
    %781 = vmatprep.subr.bf16.mxu0 0
    %782 = vmatpush1.bf16.msra.mxu0 0
    %783 = vmatprep.subr.bf16.mxu0 0
    %784 = vmatpush1.bf16.msra.mxu0 0
    %785 = vmatprep.subr.bf16.mxu0 0
    %786 = vmatpush1.bf16.msra.mxu0 0
    %787 = vmatprep.subr.bf16.mxu0 0
    %788 = vmatpush1.bf16.msra.mxu0 0
    %789 = vmatprep.mubr.bf16.mxu0 0
    %790 = vmatmul.mubr.bf16.gmra.mrb[0].mxu0 %v751
    %v791 = vpop.f32.mrb[0].mxu0
    %v792 = vadd.f32 %v709, %v791
    %v793 = vpop.f32.mrb[0].mxu0
    %v794 = vpop.f32.mrb[0].mxu0
    %v795 = vpop.f32.mrb[0].mxu0
    %796 = vdwg.mxu0
    %v797 = vtanh.pop %v792
    %v798 = vld [vmem:[#allocation5 + $0x780] sm:$0xf]
    %v799 = vld [vmem:[#allocation5 + $0x794] sm:$0xf]
    %v800 = vld [vmem:[#allocation5 + $0x7a8] sm:$0xf]
    %v801 = vld [vmem:[#allocation5 + $0x7bc] sm:$0xf]
    %v802 = vld [vmem:[#allocation5 + $0x7d0] sm:$0xf]
    %v803 = vld [vmem:[#allocation5 + $0x7e4] sm:$0xf]
    %v804 = vld [vmem:[#allocation5 + $0x7f8] sm:$0xf]
    %v805 = vld [vmem:[#allocation5 + $0x80c] sm:$0xf]
    %v806 = vld [vmem:[#allocation5 + $0x820] sm:$0xf]
    %v807 = vld [vmem:[#allocation5 + $0x834] sm:$0xf]
    %v808 = vld [vmem:[#allocation5 + $0x848] sm:$0xf]
    %v809 = vld [vmem:[#allocation5 + $0x85c] sm:$0xf]
    %v810 = vld [vmem:[#allocation5 + $0x870] sm:$0x3]
    %v811 = vpack.c.bf16 %v797, %v797
    %v812 = vld [vmem:[#allocation7 + $0x7] ss:$0 sm:$0xff]
    %v826 = vunpack.c.l.b16 %v798
    %v827 = vunpack.c.l.b16 %v799
    %v828 = vunpack.c.l.b16 %v800
    %v829 = vunpack.c.l.b16 %v801
    %v830 = vunpack.c.l.b16 %v802
    %v831 = vunpack.c.l.b16 %v803
    %v832 = vunpack.c.l.b16 %v804
    %v833 = vunpack.c.l.b16 %v805
    %v834 = vunpack.c.l.b16 %v806
    %v835 = vunpack.c.l.b16 %v807
    %v836 = vunpack.c.l.b16 %v808
    %v837 = vunpack.c.l.b16 %v809
    %v838 = vunpack.c.l.b16 %v810
    %v839 = vpack.c.b16 %v827, %v826
    %v840 = vpack.c.b16 %v829, %v828
    %v841 = vpack.c.b16 %v831, %v830
    %v842 = vpack.c.b16 %v833, %v832
    %v843 = vpack.c.b16 %v835, %v834
    %v844 = vpack.c.b16 %v837, %v836
    %v845 = vpack.c.b16 %v838, %v838
    %v853 = vsel %vm749, %v811, 0
    %v856 = vsel %vm753, %v845, 0
    %858 = vmatprep.subr.bf16.mxu0 0
    %859 = vmatpush1.bf16.msra.mxu0 %v839
    %860 = vmatprep.subr.bf16.mxu0 0
    %861 = vmatpush1.bf16.msra.mxu0 %v840
    %862 = vmatprep.subr.bf16.mxu0 0
    %863 = vmatpush1.bf16.msra.mxu0 %v841
    %864 = vmatprep.subr.bf16.mxu0 0
    %865 = vmatpush1.bf16.msra.mxu0 %v842
    %866 = vmatprep.subr.bf16.mxu0 0
    %867 = vmatpush1.bf16.msra.mxu0 %v843
    %868 = vmatprep.subr.bf16.mxu0 0
    %869 = vmatpush1.bf16.msra.mxu0 %v844
    %870 = vmatprep.subr.bf16.mxu0 0
    %871 = vmatpush1.bf16.msra.mxu0 %v856
    %872 = vmatprep.subr.bf16.mxu0 0
    %873 = vmatpush1.bf16.msra.mxu0 0
    %874 = vmatprep.subr.bf16.mxu0 0
    %875 = vmatpush1.bf16.msra.mxu0 0
    %876 = vmatprep.subr.bf16.mxu0 0
    %877 = vmatpush1.bf16.msra.mxu0 0
    %878 = vmatprep.subr.bf16.mxu0 0
    %879 = vmatpush1.bf16.msra.mxu0 0
    %880 = vmatprep.subr.bf16.mxu0 0
    %881 = vmatpush1.bf16.msra.mxu0 0
    %882 = vmatprep.subr.bf16.mxu0 0
    %883 = vmatpush1.bf16.msra.mxu0 0
    %884 = vmatprep.subr.bf16.mxu0 0
    %885 = vmatpush1.bf16.msra.mxu0 0
    %886 = vmatprep.subr.bf16.mxu0 0
    %887 = vmatpush1.bf16.msra.mxu0 0
    %888 = vmatprep.subr.bf16.mxu0 0
    %889 = vmatpush1.bf16.msra.mxu0 0
    %890 = vmatprep.mubr.bf16.mxu0 0
    %891 = vmatmul.mubr.bf16.gmra.mrb[0].mxu0 %v853
    %v892 = vpop.f32.mrb[0].mxu0
    %v893 = vadd.f32 %v812, %v892
    %v894 = vpop.f32.mrb[0].mxu0
    %v895 = vpop.f32.mrb[0].mxu0
    %v896 = vpop.f32.mrb[0].mxu0
    %897 = vdwg.mxu0
    %v898 = vtanh.pop %v893
    %v899 = vld [vmem:[#allocation5 + $0x280] sm:$0xf]
    %v900 = vld [vmem:[#allocation5 + $0x294] sm:$0xf]
    %v901 = vld [vmem:[#allocation5 + $0x2a8] sm:$0xf]
    %v902 = vld [vmem:[#allocation5 + $0x2bc] sm:$0xf]
    %v903 = vld [vmem:[#allocation5 + $0x2d0] sm:$0xf]
    %v904 = vld [vmem:[#allocation5 + $0x2e4] sm:$0xf]
    %v905 = vld [vmem:[#allocation5 + $0x2f8] sm:$0xf]
    %v906 = vld [vmem:[#allocation5 + $0x30c] sm:$0xf]
    %v907 = vld [vmem:[#allocation5 + $0x320] sm:$0xf]
    %v908 = vld [vmem:[#allocation5 + $0x334] sm:$0xf]
    %v909 = vld [vmem:[#allocation5 + $0x348] sm:$0xf]
    %v910 = vld [vmem:[#allocation5 + $0x35c] sm:$0xf]
    %v911 = vld [vmem:[#allocation5 + $0x370] sm:$0xf]
    %v912 = vld [vmem:[#allocation5 + $0x384] sm:$0xf]
    %v913 = vld [vmem:[#allocation5 + $0x398] sm:$0xf]
    %v914 = vld [vmem:[#allocation5 + $0x3ac] sm:$0xf]
    %v915 = vld [vmem:[#allocation5 + $0x3c0] sm:$0xf]
    %v916 = vld [vmem:[#allocation5 + $0x3d4] sm:$0xf]
    %v917 = vld [vmem:[#allocation5 + $0x3e8] sm:$0xf]
    %v918 = vld [vmem:[#allocation5 + $0x3fc] sm:$0xf]
    %v919 = vld [vmem:[#allocation5 + $0x410] sm:$0xf]
    %v920 = vld [vmem:[#allocation5 + $0x424] sm:$0xf]
    %v921 = vld [vmem:[#allocation5 + $0x438] sm:$0xf]
    %v922 = vld [vmem:[#allocation5 + $0x44c] sm:$0xf]
    %v923 = vld [vmem:[#allocation5 + $0x460] sm:$0xf]
    %v924 = vld [vmem:[#allocation5 + $0x474] sm:$0xf]
    %v925 = vld [vmem:[#allocation5 + $0x488] sm:$0xf]
    %v926 = vld [vmem:[#allocation5 + $0x49c] sm:$0xf]
    %v927 = vld [vmem:[#allocation5 + $0x4b0] sm:$0xf]
    %v928 = vld [vmem:[#allocation5 + $0x4c4] sm:$0xf]
    %v929 = vld [vmem:[#allocation5 + $0x4d8] sm:$0xf]
    %v930 = vld [vmem:[#allocation5 + $0x4ec] sm:$0xf]
    %v931 = vld [vmem:[#allocation5 + $0x500] sm:$0xf]
    %v932 = vld [vmem:[#allocation5 + $0x514] sm:$0xf]
    %v933 = vld [vmem:[#allocation5 + $0x528] sm:$0xf]
    %v934 = vld [vmem:[#allocation5 + $0x53c] sm:$0xf]
    %v935 = vld [vmem:[#allocation5 + $0x550] sm:$0xf]
    %v936 = vld [vmem:[#allocation5 + $0x564] sm:$0xf]
    %v937 = vld [vmem:[#allocation5 + $0x578] sm:$0xf]
    %v938 = vld [vmem:[#allocation5 + $0x58c] sm:$0xf]
    %v939 = vld [vmem:[#allocation5 + $0x5a0] sm:$0xf]
    %v940 = vld [vmem:[#allocation5 + $0x5b4] sm:$0xf]
    %v941 = vld [vmem:[#allocation5 + $0x5c8] sm:$0xf]
    %v942 = vld [vmem:[#allocation5 + $0x5dc] sm:$0xf]
    %v943 = vld [vmem:[#allocation5 + $0x5f0] sm:$0xf]
    %v944 = vld [vmem:[#allocation5 + $0x604] sm:$0xf]
    %v945 = vld [vmem:[#allocation5 + $0x618] sm:$0xf]
    %v946 = vld [vmem:[#allocation5 + $0x62c] sm:$0xf]
    %v947 = vld [vmem:[#allocation5 + $0x640] sm:$0xf]
    %v948 = vld [vmem:[#allocation5 + $0x654] sm:$0xf]
    %v949 = vld [vmem:[#allocation5 + $0x668] sm:$0xf]
    %v950 = vld [vmem:[#allocation5 + $0x67c] sm:$0xf]
    %v951 = vld [vmem:[#allocation5 + $0x690] sm:$0xf]
    %v952 = vld [vmem:[#allocation5 + $0x6a4] sm:$0xf]
    %v953 = vld [vmem:[#allocation5 + $0x6b8] sm:$0xf]
    %v954 = vld [vmem:[#allocation5 + $0x6cc] sm:$0xf]
    %v955 = vld [vmem:[#allocation5 + $0x6e0] sm:$0xf]
    %v956 = vld [vmem:[#allocation5 + $0x6f4] sm:$0xf]
    %v957 = vld [vmem:[#allocation5 + $0x708] sm:$0xf]
    %v958 = vld [vmem:[#allocation5 + $0x71c] sm:$0xf]
    %v959 = vld [vmem:[#allocation5 + $0x730] sm:$0xf]
    %v960 = vld [vmem:[#allocation5 + $0x744] sm:$0xf]
    %v961 = vld [vmem:[#allocation5 + $0x758] sm:$0x3]
    %v962 = vpack.c.bf16 %v691, %v691
    %v963 = vpack.c.bf16 %v692, %v692
    %v964 = vpack.c.bf16 %v693, %v693
    %v965 = vpack.c.bf16 %v694, %v694
    %v966 = vld [vmem:[#allocation7 + $0x6] ss:$0 sm:$0xff]
    %v1030 = vunpack.c.l.b16 %v899
    %v1031 = vunpack.c.l.b16 %v900
    %v1032 = vunpack.c.l.b16 %v901
    %v1033 = vunpack.c.l.b16 %v902
    %v1034 = vunpack.c.l.b16 %v903
    %v1035 = vunpack.c.l.b16 %v904
    %v1036 = vunpack.c.l.b16 %v905
    %v1037 = vunpack.c.l.b16 %v906
    %v1038 = vunpack.c.l.b16 %v907
    %v1039 = vunpack.c.l.b16 %v908
    %v1040 = vunpack.c.l.b16 %v909
    %v1041 = vunpack.c.l.b16 %v910
    %v1042 = vunpack.c.l.b16 %v911
    %v1043 = vunpack.c.l.b16 %v912
    %v1044 = vunpack.c.l.b16 %v913
    %v1045 = vunpack.c.l.b16 %v914
    %v1046 = vunpack.c.l.b16 %v915
    %v1047 = vunpack.c.l.b16 %v916
    %v1048 = vunpack.c.l.b16 %v917
    %v1049 = vunpack.c.l.b16 %v918
    %v1050 = vunpack.c.l.b16 %v919
    %v1051 = vunpack.c.l.b16 %v920
    %v1052 = vunpack.c.l.b16 %v921
    %v1053 = vunpack.c.l.b16 %v922
    %v1054 = vunpack.c.l.b16 %v923
    %v1055 = vunpack.c.l.b16 %v924
    %v1056 = vunpack.c.l.b16 %v925
    %v1057 = vunpack.c.l.b16 %v926
    %v1058 = vunpack.c.l.b16 %v927
    %v1059 = vunpack.c.l.b16 %v928
    %v1060 = vunpack.c.l.b16 %v929
    %v1061 = vunpack.c.l.b16 %v930
    %v1062 = vunpack.c.l.b16 %v931
    %v1063 = vunpack.c.l.b16 %v932
    %v1064 = vunpack.c.l.b16 %v933
    %v1065 = vunpack.c.l.b16 %v934
    %v1066 = vunpack.c.l.b16 %v935
    %v1067 = vunpack.c.l.b16 %v936
    %v1068 = vunpack.c.l.b16 %v937
    %v1069 = vunpack.c.l.b16 %v938
    %v1070 = vunpack.c.l.b16 %v939
    %v1071 = vunpack.c.l.b16 %v940
    %v1072 = vunpack.c.l.b16 %v941
    %v1073 = vunpack.c.l.b16 %v942
    %v1074 = vunpack.c.l.b16 %v943
    %v1075 = vunpack.c.l.b16 %v944
    %v1076 = vunpack.c.l.b16 %v945
    %v1077 = vunpack.c.l.b16 %v946
    %v1078 = vunpack.c.l.b16 %v947
    %v1079 = vunpack.c.l.b16 %v948
    %v1080 = vunpack.c.l.b16 %v949
    %v1081 = vunpack.c.l.b16 %v950
    %v1082 = vunpack.c.l.b16 %v951
    %v1083 = vunpack.c.l.b16 %v952
    %v1084 = vunpack.c.l.b16 %v953
    %v1085 = vunpack.c.l.b16 %v954
    %v1086 = vunpack.c.l.b16 %v955
    %v1087 = vunpack.c.l.b16 %v956
    %v1088 = vunpack.c.l.b16 %v957
    %v1089 = vunpack.c.l.b16 %v958
    %v1090 = vunpack.c.l.b16 %v959
    %v1091 = vunpack.c.l.b16 %v960
    %v1092 = vunpack.c.l.b16 %v961
    %v1093 = vpack.c.b16 %v1031, %v1030
    %v1094 = vpack.c.b16 %v1033, %v1032
    %v1095 = vpack.c.b16 %v1035, %v1034
    %v1096 = vpack.c.b16 %v1037, %v1036
    %v1097 = vpack.c.b16 %v1039, %v1038
    %v1098 = vpack.c.b16 %v1041, %v1040
    %v1099 = vpack.c.b16 %v1043, %v1042
    %v1100 = vpack.c.b16 %v1045, %v1044
    %v1101 = vpack.c.b16 %v1047, %v1046
    %v1102 = vpack.c.b16 %v1049, %v1048
    %v1103 = vpack.c.b16 %v1051, %v1050
    %v1104 = vpack.c.b16 %v1053, %v1052
    %v1105 = vpack.c.b16 %v1055, %v1054
    %v1106 = vpack.c.b16 %v1057, %v1056
    %v1107 = vpack.c.b16 %v1059, %v1058
    %v1108 = vpack.c.b16 %v1061, %v1060
    %v1109 = vpack.c.b16 %v1063, %v1062
    %v1110 = vpack.c.b16 %v1065, %v1064
    %v1111 = vpack.c.b16 %v1067, %v1066
    %v1112 = vpack.c.b16 %v1069, %v1068
    %v1113 = vpack.c.b16 %v1071, %v1070
    %v1114 = vpack.c.b16 %v1073, %v1072
    %v1115 = vpack.c.b16 %v1075, %v1074
    %v1116 = vpack.c.b16 %v1077, %v1076
    %v1117 = vpack.c.b16 %v1079, %v1078
    %v1118 = vpack.c.b16 %v1081, %v1080
    %v1119 = vpack.c.b16 %v1083, %v1082
    %v1120 = vpack.c.b16 %v1085, %v1084
    %v1121 = vpack.c.b16 %v1087, %v1086
    %v1122 = vpack.c.b16 %v1089, %v1088
    %v1123 = vpack.c.b16 %v1091, %v1090
    %v1124 = vpack.c.b16 %v1092, %v1092
    %vm1156 = vcmask 949248
    %v1158 = vsel %vm1156, %v965, 0
    %v1161 = vsel %vm753, %v1124, 0
    %1163 = vmatprep.subr.bf16.mxu0 0
    %1164 = vmatpush1.bf16.msra.mxu0 %v1093
    %1165 = vmatprep.subr.bf16.mxu0 0
    %1166 = vmatpush1.bf16.msra.mxu0 %v1094
    %1167 = vmatprep.subr.bf16.mxu0 0
    %1168 = vmatpush1.bf16.msra.mxu0 %v1095
    %1169 = vmatprep.subr.bf16.mxu0 0
    %1170 = vmatpush1.bf16.msra.mxu0 %v1096
    %1171 = vmatprep.subr.bf16.mxu0 0
    %1172 = vmatpush1.bf16.msra.mxu0 %v1097
    %1173 = vmatprep.subr.bf16.mxu0 0
    %1174 = vmatpush1.bf16.msra.mxu0 %v1098
    %1175 = vmatprep.subr.bf16.mxu0 0
    %1176 = vmatpush1.bf16.msra.mxu0 %v1099
    %1177 = vmatprep.subr.bf16.mxu0 0
    %1178 = vmatpush1.bf16.msra.mxu0 %v1100
    %1179 = vmatprep.subr.bf16.mxu0 0
    %1180 = vmatpush1.bf16.msra.mxu0 %v1101
    %1181 = vmatprep.subr.bf16.mxu0 0
    %1182 = vmatpush1.bf16.msra.mxu0 %v1102
    %1183 = vmatprep.subr.bf16.mxu0 0
    %1184 = vmatpush1.bf16.msra.mxu0 %v1103
    %1185 = vmatprep.subr.bf16.mxu0 0
    %1186 = vmatpush1.bf16.msra.mxu0 %v1104
    %1187 = vmatprep.subr.bf16.mxu0 0
    %1188 = vmatpush1.bf16.msra.mxu0 %v1105
    %1189 = vmatprep.subr.bf16.mxu0 0
    %1190 = vmatpush1.bf16.msra.mxu0 %v1106
    %1191 = vmatprep.subr.bf16.mxu0 0
    %1192 = vmatpush1.bf16.msra.mxu0 %v1107
    %1193 = vmatprep.subr.bf16.mxu0 0
    %1194 = vmatpush1.bf16.msra.mxu0 %v1108
    %1195 = vmatprep.mubr.bf16.mxu0 %v963
    %1196 = vmatmul.mubr.bf16.gmra.mrb[0].mxu0 %v962
    %v1197 = vpop.f32.mrb[0].mxu0
    %v1198 = vadd.f32 %v966, %v1197
    %v1199 = vpop.f32.mrb[0].mxu0
    %v1200 = vpop.f32.mrb[0].mxu0
    %v1201 = vpop.f32.mrb[0].mxu0
    %1202 = vdwg.mxu0
    %1203 = vmatprep.subr.bf16.mxu0 0
    %1204 = vmatpush1.bf16.msra.mxu0 %v1109
    %1205 = vmatprep.subr.bf16.mxu0 0
    %1206 = vmatpush1.bf16.msra.mxu0 %v1110
    %1207 = vmatprep.subr.bf16.mxu0 0
    %1208 = vmatpush1.bf16.msra.mxu0 %v1111
    %1209 = vmatprep.subr.bf16.mxu0 0
    %1210 = vmatpush1.bf16.msra.mxu0 %v1112
    %1211 = vmatprep.subr.bf16.mxu0 0
    %1212 = vmatpush1.bf16.msra.mxu0 %v1113
    %1213 = vmatprep.subr.bf16.mxu0 0
    %1214 = vmatpush1.bf16.msra.mxu0 %v1114
    %1215 = vmatprep.subr.bf16.mxu0 0
    %1216 = vmatpush1.bf16.msra.mxu0 %v1115
    %1217 = vmatprep.subr.bf16.mxu0 0
    %1218 = vmatpush1.bf16.msra.mxu0 %v1116
    %1219 = vmatprep.subr.bf16.mxu0 0
    %1220 = vmatpush1.bf16.msra.mxu0 %v1117
    %1221 = vmatprep.subr.bf16.mxu0 0
    %1222 = vmatpush1.bf16.msra.mxu0 %v1118
    %1223 = vmatprep.subr.bf16.mxu0 0
    %1224 = vmatpush1.bf16.msra.mxu0 %v1119
    %1225 = vmatprep.subr.bf16.mxu0 0
    %1226 = vmatpush1.bf16.msra.mxu0 %v1120
    %1227 = vmatprep.subr.bf16.mxu0 0
    %1228 = vmatpush1.bf16.msra.mxu0 %v1121
    %1229 = vmatprep.subr.bf16.mxu0 0
    %1230 = vmatpush1.bf16.msra.mxu0 %v1122
    %1231 = vmatprep.subr.bf16.mxu0 0
    %1232 = vmatpush1.bf16.msra.mxu0 %v1123
    %1233 = vmatprep.subr.bf16.mxu0 0
    %1234 = vmatpush1.bf16.msra.mxu0 %v1161
    %1235 = vmatprep.mubr.bf16.mxu0 %v1158
    %1236 = vmatmul.mubr.bf16.gmra.mrb[0].mxu0 %v964
    %v1237 = vpop.f32.mrb[0].mxu0
    %v1238 = vadd.f32 %v1198, %v1237
    %v1239 = vpop.f32.mrb[0].mxu0
    %v1240 = vpop.f32.mrb[0].mxu0
    %v1241 = vpop.f32.mrb[0].mxu0
    %1242 = vdwg.mxu0
    %v1243 = vtanh.pop %v1238
    %v1244 = vld [vmem:[#allocation5 + $0x898] sm:$0xf]
    %v1245 = vld [vmem:[#allocation5 + $0x8ac] sm:$0xf]
    %v1246 = vld [vmem:[#allocation5 + $0x8c0] sm:$0xf]
    %v1247 = vld [vmem:[#allocation5 + $0x8d4] sm:$0xf]
    %v1248 = vld [vmem:[#allocation5 + $0x8e8] sm:$0xf]
    %v1249 = vld [vmem:[#allocation5 + $0x8fc] sm:$0xf]
    %v1250 = vld [vmem:[#allocation5 + $0x910] sm:$0xf]
    %v1251 = vld [vmem:[#allocation5 + $0x924] sm:$0xf]
    %v1252 = vld [vmem:[#allocation5 + $0x938] sm:$0xf]
    %v1253 = vld [vmem:[#allocation5 + $0x94c] sm:$0xf]
    %v1254 = vld [vmem:[#allocation5 + $0x960] sm:$0xf]
    %v1255 = vld [vmem:[#allocation5 + $0x974] sm:$0xf]
    %v1256 = vld [vmem:[#allocation5 + $0x988] sm:$0x3]
    %v1257 = vpack.c.bf16 %v1243, %v1243
    %v1258 = vld [vmem:[#allocation7 + $0x28] ss:$0 sm:$0xff]
    %v1272 = vunpack.c.l.b16 %v1244
    %v1273 = vunpack.c.l.b16 %v1245
    %v1274 = vunpack.c.l.b16 %v1246
    %v1275 = vunpack.c.l.b16 %v1247
    %v1276 = vunpack.c.l.b16 %v1248
    %v1277 = vunpack.c.l.b16 %v1249
    %v1278 = vunpack.c.l.b16 %v1250
    %v1279 = vunpack.c.l.b16 %v1251
    %v1280 = vunpack.c.l.b16 %v1252
    %v1281 = vunpack.c.l.b16 %v1253
    %v1282 = vunpack.c.l.b16 %v1254
    %v1283 = vunpack.c.l.b16 %v1255
    %v1284 = vunpack.c.l.b16 %v1256
    %v1285 = vpack.c.b16 %v1273, %v1272
    %v1286 = vpack.c.b16 %v1275, %v1274
    %v1287 = vpack.c.b16 %v1277, %v1276
    %v1288 = vpack.c.b16 %v1279, %v1278
    %v1289 = vpack.c.b16 %v1281, %v1280
    %v1290 = vpack.c.b16 %v1283, %v1282
    %v1291 = vpack.c.b16 %v1284, %v1284
    %v1299 = vsel %vm749, %v1257, 0
    %v1302 = vsel %vm753, %v1291, 0
    %1304 = vmatprep.subr.bf16.mxu0 0
    %1305 = vmatpush1.bf16.msra.mxu0 %v1285
    %1306 = vmatprep.subr.bf16.mxu0 0
    %1307 = vmatpush1.bf16.msra.mxu0 %v1286
    %1308 = vmatprep.subr.bf16.mxu0 0
    %1309 = vmatpush1.bf16.msra.mxu0 %v1287
    %1310 = vmatprep.subr.bf16.mxu0 0
    %1311 = vmatpush1.bf16.msra.mxu0 %v1288
    %1312 = vmatprep.subr.bf16.mxu0 0
    %1313 = vmatpush1.bf16.msra.mxu0 %v1289
    %1314 = vmatprep.subr.bf16.mxu0 0
    %1315 = vmatpush1.bf16.msra.mxu0 %v1290
    %1316 = vmatprep.subr.bf16.mxu0 0
    %1317 = vmatpush1.bf16.msra.mxu0 %v1302
    %1318 = vmatprep.subr.bf16.mxu0 0
    %1319 = vmatpush1.bf16.msra.mxu0 0
    %1320 = vmatprep.subr.bf16.mxu0 0
    %1321 = vmatpush1.bf16.msra.mxu0 0
    %1322 = vmatprep.subr.bf16.mxu0 0
    %1323 = vmatpush1.bf16.msra.mxu0 0
    %1324 = vmatprep.subr.bf16.mxu0 0
    %1325 = vmatpush1.bf16.msra.mxu0 0
    %1326 = vmatprep.subr.bf16.mxu0 0
    %1327 = vmatpush1.bf16.msra.mxu0 0
    %1328 = vmatprep.subr.bf16.mxu0 0
    %1329 = vmatpush1.bf16.msra.mxu0 0
    %1330 = vmatprep.subr.bf16.mxu0 0
    %1331 = vmatpush1.bf16.msra.mxu0 0
    %1332 = vmatprep.subr.bf16.mxu0 0
    %1333 = vmatpush1.bf16.msra.mxu0 0
    %1334 = vmatprep.subr.bf16.mxu0 0
    %1335 = vmatpush1.bf16.msra.mxu0 0
    %1336 = vmatprep.mubr.bf16.mxu0 0
    %1337 = vmatmul.mubr.bf16.gmra.mrb[0].mxu0 %v1299
    %v1338 = vpop.f32.mrb[0].mxu0
    %v1339 = vadd.f32 %v1258, %v1338
    %v1340 = vpop.f32.mrb[0].mxu0
    %v1341 = vpop.f32.mrb[0].mxu0
    %v1342 = vpop.f32.mrb[0].mxu0
    %1343 = vdwg.mxu0
    %1344 = vst [vmem:[#allocation8] sm:$0xff] 0.0
    %vm1345 = vcmask 31744
    %1346 = vst.msk [vmem:[#allocation8] sm:$0xff] %vm1345, %v898
    %1348 = vrot.lane.b32.xlu0 %v1339, 4
    %v1349 = vpop.permute.xlu0 %1348
    %vm1351 = vcmask 39968
    %1352 = vst.msk [vmem:[#allocation8] sm:$0xff] %vm1351, %v1349
    %1354 = vrot.lane.b32.xlu0 %v304, 5
    %v1355 = vpop.permute.xlu0 %1354
    %vm1357 = vcmask 98344
    %1358 = vst.msk [vmem:[#allocation8] sm:$0x1] %vm1357, %v1355
    %vm1359 = vcmask 163944
    %1360 = vst.msk [vmem:[#allocation8] sm:$0x1] %vm1359, %v1355
    %1362 = vrot.lane.b32.xlu0 %v317, 21
    %v1363 = vpop.permute.xlu0 %1362
    %vm1365 = vcmask 229544
    %1366 = vst.msk [vmem:[#allocation8] sm:$0x1] %vm1365, %v1363
    // Predicated region
    $region26: #{tpu_custom_call.1} parent=1 // pred_check
      _
    $region27: #{tpu_custom_call.1} parent=1 // pred_check_branch
      %1368 = sbr.rel (0) target = $region29
    $region28: #{tpu_custom_call.1} parent=1 // pred_region
      %s1370 = ssub.s32 128, 128
      %1371 = vsyncadd [#allocation4], %s1370
      %s1373 = sshll.u32 [#allocation8], 4
      %s1374 = int_to_ptr.vmem [resolvable:$true] %s1373
      %1376 = dma.vmem_to_hbm [thread:$0]  %s1374, 128, %s3, [#allocation4]
    $region29: #{tpu_custom_call.1} parent=1 // pred_fallthru
      _
    // Predicated region
    $region30: #{tpu_custom_call.1} parent=1 // pred_check
      _
    $region31: #{tpu_custom_call.1} parent=1 // pred_check_branch
      %1378 = sbr.rel (0) target = $region33
    $region32: #{tpu_custom_call.1} parent=1 // pred_region
      %1379 = dma.done [#allocation4], 128
    $region33: #{tpu_custom_call.1} parent=1 // pred_fallthru
      _
    %1380 = vsyncpa [#allocation3], 1
    %1381 = vsyncpa [#allocation6], 1
    %1382 = vsyncpa [#allocation4], 1

</llo_original>
